<compile_context>
chip_gen: v7x
topology: tpu7x:2x2x1
jax: 0.10.0
libtpu: 0.0.40
codegen_flags: <defaults>
</compile_context>

<pallas_src>
import functools
import math

import jax
import jax.numpy as jnp
from jax.experimental import pallas as pl
from jax.experimental.pallas import tpu as pltpu


# ----------------------------- in-kernel helpers -----------------------------

def _layernorm(x, eps=1e-6):
    # LayerNorm without affine params (elementwise_affine=False), biased variance.
    mu = jnp.mean(x, axis=-1, keepdims=True)
    var = jnp.mean((x - mu) ** 2, axis=-1, keepdims=True)
    return (x - mu) * jax.lax.rsqrt(var + eps)


def _gelu_tanh(x):
    # nn.GELU(approximate='tanh')
    k = math.sqrt(2.0 / math.pi)
    return 0.5 * x * (1.0 + jnp.tanh(k * (x + 0.044715 * x * x * x)))


# ------------------------------ Pallas kernels -------------------------------

def qkv_kernel(x_ref, shift_ref, scale_ref, w_qkv_ref, b_qkv_ref,
               q_ref, k_ref, v_ref):
    """LN1 + adaLN modulate + QKV projection for one (batch, seq-tile).

    Emits Q/K/V already head-split in (H, TN, hd) layout so the consumer kernel
    needs no relayout and the wrapper needs no extra HBM round trip.
    """
    H, hd = q_ref.shape[1], q_ref.shape[3]
    D = H * hd
    x = x_ref[0]                                              # (TN, D), f32
    h = _layernorm(x) * (1.0 + scale_ref[0]) + shift_ref[0]   # f32 elementwise
    qkv = jnp.dot(h.astype(w_qkv_ref.dtype), w_qkv_ref[...],
                  preferred_element_type=jnp.float32) + b_qkv_ref[...]  # (TN, 3D) f32
    # Static unrolled per-head lane-slice stores (XLU relayout, no extra matmuls).
    for hh in range(H):
        q_ref[0, hh] = qkv[:, 0 * D + hh * hd:0 * D + (hh + 1) * hd].astype(q_ref.dtype)
        k_ref[0, hh] = qkv[:, 1 * D + hh * hd:1 * D + (hh + 1) * hd].astype(k_ref.dtype)
        v_ref[0, hh] = qkv[:, 2 * D + hh * hd:2 * D + (hh + 1) * hd].astype(v_ref.dtype)


def attn_mlp_kernel(x_ref, q_ref, k_ref, v_ref,
                    gate_msa_ref, shift_mlp_ref, scale_mlp_ref, gate_mlp_ref,
                    w_proj_ref, b_proj_ref,
                    w_fc1_ref, b_fc1_ref, w_fc2_ref, b_fc2_ref,
                    o_ref, *, fused_head_merge):
    """Attention core + out-proj + residual + LN2 + modulate + MLP + residual."""
    x = x_ref[0]          # (TN, D)   f32
    q = q_ref[0]          # (H, TN, hd)  (Q pre-scaled by hd**-0.5 via weights)
    k = k_ref[0]          # (H, N,  hd)
    v = v_ref[0]          # (H, N,  hd)

    # ---- batched attention over all heads (single dot_generals) ----
    s = jnp.einsum('hqd,hkd->hqk', q, k, preferred_element_type=jnp.float32)
    s = s - jnp.max(s, axis=-1, keepdims=True)
    p = jnp.exp(s)                                            # f32 (EUP)
    p = p * pl.reciprocal(jnp.sum(p, axis=-1, keepdims=True), approx=True)
    o = jnp.einsum('hqk,hkd->hqd', p.astype(v.dtype), v,
                   preferred_element_type=jnp.float32)        # (H, TN, hd) f32
    o = o.astype(w_proj_ref.dtype)

    # ---- head merge + output projection ----
    if fused_head_merge:
        # Single MXU contraction over (h, hd) == full D; no (H, TN, D) scratch.
        attn = jax.lax.dot_general(
            o, w_proj_ref[...],
            dimension_numbers=(((0, 2), (0, 1)), ((), ())),
            preferred_element_type=jnp.float32)               # (TN, D)
    else:
        proj = jnp.einsum('hqd,hdo->hqo', o, w_proj_ref[...],
                          preferred_element_type=jnp.float32)
        attn = jnp.sum(proj, axis=0)
    attn = attn + b_proj_ref[...]

    x = x + gate_msa_ref[0] * attn

    # ---- MLP branch (LN stats are per-row, so per-tile is exact) ----
    h2 = _layernorm(x) * (1.0 + scale_mlp_ref[0]) + shift_mlp_ref[0]
    m = jnp.dot(h2.astype(w_fc1_ref.dtype), w_fc1_ref[...],
                preferred_element_type=jnp.float32) + b_fc1_ref[...]
    m = _gelu_tanh(m)                                         # f32 (EUP/VPU)
    m = jnp.dot(m.astype(w_fc2_ref.dtype), w_fc2_ref[...],
                preferred_element_type=jnp.float32) + b_fc2_ref[...]
    o_ref[0] = (x + gate_mlp_ref[0] * m).astype(o_ref.dtype)


# --------------------------- config / tiling helpers -------------------------

def _tpu_config():
    """Generation-aware VMEM limit and tile caps (v7x has 64 MiB VMEM per TC)."""
    vmem_cap = None
    try:
        vmem_cap = int(pltpu.get_tpu_info().vmem_capacity_bytes)
    except Exception:
        pass
    if vmem_cap is not None and vmem_cap <= 64 * 1024 * 1024:     # v7x-class
        return dict(vmem_limit=48 * 1024 * 1024, tile1_cap=256, tile2_cap=128)
    if vmem_cap is not None:                                       # v5e / v6e (128 MiB)
        return dict(vmem_limit=96 * 1024 * 1024, tile1_cap=512, tile2_cap=256)
    return dict(vmem_limit=64 * 1024 * 1024, tile1_cap=512, tile2_cap=256)


def _pick_tile(n, cap):
    """Largest divisor of n that is <= cap."""
    cap = max(1, min(cap, n))
    for t in range(cap, 0, -1):
        if n % t == 0:
            return t
    return n


# --------------------------------- wrapper ------------------------------------

def _vit_block_impl(x, c, params, *, num_heads, tile_n1, tile_n2, matmul_dtype,
                    vmem_limit, single_buffer, fused_head_merge):
    B, N, D = x.shape
    H = num_heads
    hd = D // H
    (w_ada, b_ada, w_qkv, b_qkv, w_proj, b_proj,
     w_fc1, b_fc1, w_fc2, b_fc2) = params

    assert N % tile_n1 == 0 and N % tile_n2 == 0
    n_tiles1 = N // tile_n1
    n_tiles2 = N // tile_n2

    # ---- adaLN modulation hoisted to XLA (tiny (B,D)x(D,6D) matmul) ----
    c_act = c * jax.nn.sigmoid(c)                             # SiLU
    mod = c_act @ w_ada + b_ada.reshape(-1)                   # (B, 6D)
    (shift_msa, scale_msa, gate_msa,
     shift_mlp, scale_mlp, gate_mlp) = [
        mod[:, i * D:(i + 1) * D].reshape(B, 1, D) for i in range(6)]

    # ---- fold attention softmax scale into the Q columns of w_qkv / b_qkv ----
    scale = hd ** -0.5
    col_scale = jnp.concatenate([
        jnp.full((D,), scale, dtype=w_qkv.dtype),
        jnp.ones((2 * D,), dtype=w_qkv.dtype)])
    # Weight matrices in matmul_dtype (bf16 by default); biases stay f32.
    w_qkv_c = (w_qkv * col_scale[None, :]).astype(matmul_dtype)
    b_qkv_c = (b_qkv * col_scale[None, :]).astype(jnp.float32)
    w_proj3 = w_proj.reshape(H, hd, D).astype(matmul_dtype)
    b_proj_c = b_proj.astype(jnp.float32)
    w_fc1_c = w_fc1.astype(matmul_dtype)
    b_fc1_c = b_fc1.astype(jnp.float32)
    w_fc2_c = w_fc2.astype(matmul_dtype)
    b_fc2_c = b_fc2.astype(jnp.float32)

    cparams = pltpu.CompilerParams(
        dimension_semantics=("parallel", "parallel"),
        vmem_limit_bytes=vmem_limit)

    def const_spec(arr):
        # Grid-constant (full-array) weight/bias: block index never changes, so
        # single-buffer it when supported (halves its VMEM footprint).
        nd = arr.ndim
        if single_buffer:
            return pl.BlockSpec(arr.shape, lambda b, n, _nd=nd: (0,) * _nd,
                                pipeline_mode=pl.Buffered(buffer_count=1))
        return pl.BlockSpec(arr.shape, lambda b, n, _nd=nd: (0,) * _nd)

    def kv_spec(shape):
        # Full-N K/V: block index only depends on b (resident across the inner
        # n loop); single-buffer when supported.
        if single_buffer:
            return pl.BlockSpec(shape, lambda b, n: (b, 0, 0, 0),
                                pipeline_mode=pl.Buffered(buffer_count=1))
        return pl.BlockSpec(shape, lambda b, n: (b, 0, 0, 0))

    # ---- kernel 1: LN1 + modulate + QKV + head split, grid (B, N-tiles) ----
    qkv_dtype = matmul_dtype
    qkv_shape = jax.ShapeDtypeStruct((B, H, N, hd), qkv_dtype)
    qkv_out_spec = pl.BlockSpec((1, H, tile_n1, hd), lambda b, n: (b, 0, n, 0))
    q, k, v = pl.pallas_call(
        qkv_kernel,
        out_shape=(qkv_shape, qkv_shape, qkv_shape),
        grid=(B, n_tiles1),
        in_specs=[
            pl.BlockSpec((1, tile_n1, D), lambda b, n: (b, n, 0)),   # x tile
            pl.BlockSpec((1, 1, D), lambda b, n: (b, 0, 0)),         # shift_msa
            pl.BlockSpec((1, 1, D), lambda b, n: (b, 0, 0)),         # scale_msa
            const_spec(w_qkv_c), const_spec(b_qkv_c),
        ],
        out_specs=(qkv_out_spec, qkv_out_spec, qkv_out_spec),
        compiler_params=cparams,
    )(x, shift_msa, scale_msa, w_qkv_c, b_qkv_c)

    # ---- kernel 2: attention + proj + residual + LN2 + MLP + residual ----
    kernel2 = functools.partial(attn_mlp_kernel, fused_head_merge=fused_head_merge)
    out = pl.pallas_call(
        kernel2,
        out_shape=jax.ShapeDtypeStruct((B, N, D), x.dtype),
        grid=(B, n_tiles2),
        in_specs=[
            pl.BlockSpec((1, tile_n2, D), lambda b, n: (b, n, 0)),          # x tile
            pl.BlockSpec((1, H, tile_n2, hd), lambda b, n: (b, 0, n, 0)),   # q tile
            kv_spec((1, H, N, hd)),                                         # k (full N)
            kv_spec((1, H, N, hd)),                                         # v (full N)
            pl.BlockSpec((1, 1, D), lambda b, n: (b, 0, 0)),                # gate_msa
            pl.BlockSpec((1, 1, D), lambda b, n: (b, 0, 0)),                # shift_mlp
            pl.BlockSpec((1, 1, D), lambda b, n: (b, 0, 0)),                # scale_mlp
            pl.BlockSpec((1, 1, D), lambda b, n: (b, 0, 0)),                # gate_mlp
            const_spec(w_proj3), const_spec(b_proj_c),
            const_spec(w_fc1_c), const_spec(b_fc1_c),
            const_spec(w_fc2_c), const_spec(b_fc2_c),
        ],
        out_specs=pl.BlockSpec((1, tile_n2, D), lambda b, n: (b, n, 0)),
        compiler_params=cparams,
    )(x, q, k, v, gate_msa, shift_mlp, scale_mlp, gate_mlp,
      w_proj3, b_proj_c, w_fc1_c, b_fc1_c, w_fc2_c, b_fc2_c)
    return out


def vit_block(x, c, params, *, num_heads, tile_n=None, matmul_dtype=jnp.bfloat16):
    B, N, D = x.shape
    cfg = _tpu_config()
    if tile_n is None:
        tile_n1 = _pick_tile(N, cfg["tile1_cap"])   # kernel 1 is a plain GEMM: bigger tile
        tile_n2 = _pick_tile(N, cfg["tile2_cap"])   # kernel 2 is VMEM-bound: smaller tile
    else:
        assert N % tile_n == 0, "sequence length must be divisible by tile_n"
        tile_n1 = tile_n2 = tile_n

    kwargs = dict(num_heads=num_heads, tile_n1=tile_n1, tile_n2=tile_n2,
                  matmul_dtype=matmul_dtype, vmem_limit=cfg["vmem_limit"])
    # Fast path: single-buffered constant/K-V BlockSpecs + (h,hd)-contracting
    # dot_general head merge.  Fall back to the previously-validated
    # conservative configuration if the installed Mosaic rejects either.
    # (Only valid for eager use; under jit the fallback would not trigger.)
    try:
        return _vit_block_impl(x, c, params, single_buffer=True,
                               fused_head_merge=True, **kwargs)
    except Exception:
        return _vit_block_impl(x, c, params, single_buffer=False,
                               fused_head_merge=False, **kwargs)


# --------------------------- pure-JAX reference -----------------------------

def vit_block_ref(x, c, params, *, num_heads):
    (w_ada, b_ada, w_qkv, b_qkv, w_proj, b_proj,
     w_fc1, b_fc1, w_fc2, b_fc2) = params
    B, N, D = x.shape
    hd = D // num_heads

    def ln(t, eps=1e-6):
        mu = t.mean(-1, keepdims=True)
        var = ((t - mu) ** 2).mean(-1, keepdims=True)
        return (t - mu) / jnp.sqrt(var + eps)

    c_act = c * jax.nn.sigmoid(c)
    mod = c_act @ w_ada + b_ada[0]
    shift_msa, scale_msa, gate_msa, shift_mlp, scale_mlp, gate_mlp = jnp.split(mod, 6, axis=-1)

    h = ln(x) * (1 + scale_msa[:, None, :]) + shift_msa[:, None, :]
    qkv = h @ w_qkv + b_qkv[0]
    q, k, v = jnp.split(qkv, 3, axis=-1)
    q = q.reshape(B, N, num_heads, hd).transpose(0, 2, 1, 3)
    k = k.reshape(B, N, num_heads, hd).transpose(0, 2, 1, 3)
    v = v.reshape(B, N, num_heads, hd).transpose(0, 2, 1, 3)
    attn = jax.nn.softmax((q @ k.transpose(0, 1, 3, 2)) * (hd ** -0.5), axis=-1)
    o = (attn @ v).transpose(0, 2, 1, 3).reshape(B, N, D)
    o = o @ w_proj + b_proj[0]
    x = x + gate_msa[:, None, :] * o

    h2 = ln(x) * (1 + scale_mlp[:, None, :]) + shift_mlp[:, None, :]
    m = h2 @ w_fc1 + b_fc1[0]
    kc = math.sqrt(2.0 / math.pi)
    m = 0.5 * m * (1 + jnp.tanh(kc * (m + 0.044715 * m ** 3)))
    m = m @ w_fc2 + b_fc2[0]
    return x + gate_mlp[:, None, :] * m


# ----------------------------------- main ------------------------------------

if __name__ == "__main__":
    B, N, D = 2, 8, 32
    num_heads = 4
    mlp_ratio = 4.0
    mlp_hidden = int(D * mlp_ratio)

    key = jax.random.PRNGKey(0)
    ks = jax.random.split(key, 12)

    def init(k, shape, scale=0.02):
        return (scale * jax.random.normal(k, shape)).astype(jnp.float32)

    params = (
        init(ks[0], (D, 6 * D)),        init(ks[1], (1, 6 * D)),      # adaLN linear
        init(ks[2], (D, 3 * D)),        init(ks[3], (1, 3 * D)),      # qkv (bias=True)
        init(ks[4], (D, D)),            init(ks[5], (1, D)),          # attn proj
        init(ks[6], (D, mlp_hidden)),   init(ks[7], (1, mlp_hidden)), # mlp fc1
        init(ks[8], (mlp_hidden, D)),   init(ks[9], (1, D)),          # mlp fc2
    )

    x = jax.random.normal(ks[10], (B, N, D), dtype=jnp.float32)
    c = jax.random.normal(ks[11], (B, D), dtype=jnp.float32)

    ref = vit_block_ref(x, c, params, num_heads=num_heads)

    # f32-matmul path: tight numerical check of the kernel structure.
    out_f32 = vit_block(x, c, params, num_heads=num_heads, matmul_dtype=jnp.float32)
    out_f32 = jax.block_until_ready(out_f32)
    assert out_f32.shape == (B, N, D)
    assert jnp.allclose(out_f32, ref, rtol=1e-4, atol=3e-4), \
        f"f32 path max abs err {jnp.max(jnp.abs(out_f32 - ref))}"

    # Default bf16-matmul path (production config): looser tolerance.
    out = vit_block(x, c, params, num_heads=num_heads)
    out = jax.block_until_ready(out)
    assert out.shape == (B, N, D)
    assert jnp.allclose(out.astype(jnp.float32), ref, rtol=2e-2, atol=2e-2), \
        f"bf16 path max abs err {jnp.max(jnp.abs(out.astype(jnp.float32) - ref))}"

    print("KERNEL_OK")
</pallas_src>

<mosaic_0001>
module attributes {stable_mosaic.version = 11 : i64} {
  func.func @qkv_kernel(%arg0: i32, %arg1: i32, %arg2: memref<1x8x32xf32, #tpu.memory_space<vmem>>, %arg3: memref<1x1x32xf32, #tpu.memory_space<vmem>>, %arg4: memref<1x1x32xf32, #tpu.memory_space<vmem>>, %arg5: memref<32x96xf32, #tpu.memory_space<vmem>>, %arg6: memref<1x96xf32, #tpu.memory_space<vmem>>, %arg7: memref<1x4x8x8xf32, #tpu.memory_space<vmem>>, %arg8: memref<1x4x8x8xf32, #tpu.memory_space<vmem>>, %arg9: memref<1x4x8x8xf32, #tpu.memory_space<vmem>>) attributes {dimension_semantics = [#tpu.dimension_semantics<parallel>, #tpu.dimension_semantics<parallel>], iteration_bounds = array<i64: 2, 1>, scalar_prefetch = 0 : i64, scratch_operands = 0 : i64, tpu.core_type = #tpu.core_type<tc>, window_params = [{transform_indices = @transform_0, window_bounds = array<i64: 1, 8, 32>}, {transform_indices = @transform_1, window_bounds = array<i64: 1, 1, 32>}, {transform_indices = @transform_2, window_bounds = array<i64: 1, 1, 32>}, {pipeline_mode = #tpu.pipeline_mode<synchronous>, transform_indices = @transform_3, window_bounds = array<i64: 32, 96>}, {pipeline_mode = #tpu.pipeline_mode<synchronous>, transform_indices = @transform_4, window_bounds = array<i64: 1, 96>}, {transform_indices = @transform_5, window_bounds = array<i64: 1, 4, 8, 8>}, {transform_indices = @transform_6, window_bounds = array<i64: 1, 4, 8, 8>}, {transform_indices = @transform_7, window_bounds = array<i64: 1, 4, 8, 8>}]} {
    %c0 = arith.constant 0 : index
    %c0_0 = arith.constant 0 : index
    %c0_1 = arith.constant 0 : index
    %0 = vector.load %arg2[%c0, %c0_0, %c0_1] : memref<1x8x32xf32, #tpu.memory_space<vmem>>, vector<1x8x32xf32>
    %1 = vector.shape_cast %0 : vector<1x8x32xf32> to vector<8x32xf32>
    %cst = arith.constant dense<0.000000e+00> : vector<8xf32>
    %2 = vector.multi_reduction <add>, %1, %cst [1] : vector<8x32xf32> to vector<8xf32>
    %3 = vector.shape_cast %2 : vector<8xf32> to vector<8x1xf32>
    %cst_2 = arith.constant 3.200000e+01 : f32
    %4 = vector.broadcast %cst_2 : f32 to vector<8x1xf32>
    %5 = arith.divf %3, %4 : vector<8x1xf32>
    %6 = vector.broadcast %5 : vector<8x1xf32> to vector<8x32xf32>
    %7 = arith.subf %1, %6 : vector<8x32xf32>
    %8 = arith.mulf %7, %7 : vector<8x32xf32>
    %cst_3 = arith.constant dense<0.000000e+00> : vector<8xf32>
    %9 = vector.multi_reduction <add>, %8, %cst_3 [1] : vector<8x32xf32> to vector<8xf32>
    %10 = vector.shape_cast %9 : vector<8xf32> to vector<8x1xf32>
    %cst_4 = arith.constant 3.200000e+01 : f32
    %11 = vector.broadcast %cst_4 : f32 to vector<8x1xf32>
    %12 = arith.divf %10, %11 : vector<8x1xf32>
    %13 = vector.broadcast %5 : vector<8x1xf32> to vector<8x32xf32>
    %14 = arith.subf %1, %13 : vector<8x32xf32>
    %cst_5 = arith.constant 9.99999997E-7 : f32
    %15 = vector.broadcast %cst_5 : f32 to vector<8x1xf32>
    %16 = arith.addf %12, %15 : vector<8x1xf32>
    %17 = math.rsqrt %16 : vector<8x1xf32>
    %18 = vector.broadcast %17 : vector<8x1xf32> to vector<8x32xf32>
    %19 = arith.mulf %14, %18 : vector<8x32xf32>
    %c0_6 = arith.constant 0 : index
    %c0_7 = arith.constant 0 : index
    %c0_8 = arith.constant 0 : index
    %20 = vector.load %arg4[%c0_6, %c0_7, %c0_8] : memref<1x1x32xf32, #tpu.memory_space<vmem>>, vector<1x1x32xf32>
    %21 = vector.shape_cast %20 : vector<1x1x32xf32> to vector<1x32xf32>
    %cst_9 = arith.constant 1.000000e+00 : f32
    %22 = vector.broadcast %cst_9 : f32 to vector<1x32xf32>
    %23 = arith.addf %22, %21 : vector<1x32xf32>
    %24 = vector.broadcast %23 : vector<1x32xf32> to vector<8x32xf32>
    %25 = arith.mulf %19, %24 : vector<8x32xf32>
    %c0_10 = arith.constant 0 : index
    %c0_11 = arith.constant 0 : index
    %c0_12 = arith.constant 0 : index
    %26 = vector.load %arg3[%c0_10, %c0_11, %c0_12] : memref<1x1x32xf32, #tpu.memory_space<vmem>>, vector<1x1x32xf32>
    %27 = vector.shape_cast %26 : vector<1x1x32xf32> to vector<1x32xf32>
    %28 = vector.broadcast %27 : vector<1x32xf32> to vector<8x32xf32>
    %29 = arith.addf %25, %28 : vector<8x32xf32>
    %c0_13 = arith.constant 0 : index
    %c0_14 = arith.constant 0 : index
    %30 = vector.load %arg5[%c0_13, %c0_14] : memref<32x96xf32, #tpu.memory_space<vmem>>, vector<32x96xf32>
    %cst_15 = arith.constant dense<0.000000e+00> : vector<8x96xf32>
    %31 = tpu.matmul %29, %30, %cst_15 {dimension_numbers = #tpu.dot_dimension_numbers<[1], [0], [0], [1], [0, 0, 1, 1], [], []>} : vector<8x32xf32>, vector<32x96xf32>, vector<8x96xf32> -> vector<8x96xf32>
    %c0_16 = arith.constant 0 : index
    %c0_17 = arith.constant 0 : index
    %32 = vector.load %arg6[%c0_16, %c0_17] : memref<1x96xf32, #tpu.memory_space<vmem>>, vector<1x96xf32>
    %33 = vector.broadcast %32 : vector<1x96xf32> to vector<8x96xf32>
    %34 = arith.addf %31, %33 : vector<8x96xf32>
    %35 = vector.extract_strided_slice %34 {offsets = [0, 0], sizes = [8, 8], strides = [1, 1]} : vector<8x96xf32> to vector<8x8xf32>
    %c0_18 = arith.constant 0 : index
    %c0_19 = arith.constant 0 : index
    %c0_20 = arith.constant 0 : index
    %c0_21 = arith.constant 0 : index
    %36 = vector.load %arg7[%c0_18, %c0_19, %c0_20, %c0_21] : memref<1x4x8x8xf32, #tpu.memory_space<vmem>>, vector<1x1x8x8xf32>
    %37 = vector.shape_cast %36 : vector<1x1x8x8xf32> to vector<8x8xf32>
    %38 = vector.shape_cast %35 : vector<8x8xf32> to vector<1x1x8x8xf32>
    tpu.vector_store %arg7[%c0_18, %c0_19, %c0_20, %c0_21], %38 {strides = array<i32>} : memref<1x4x8x8xf32, #tpu.memory_space<vmem>>, vector<1x1x8x8xf32>,
    %39 = vector.extract_strided_slice %34 {offsets = [0, 32], sizes = [8, 8], strides = [1, 1]} : vector<8x96xf32> to vector<8x8xf32>
    %c0_22 = arith.constant 0 : index
    %c0_23 = arith.constant 0 : index
    %c0_24 = arith.constant 0 : index
    %c0_25 = arith.constant 0 : index
    %40 = vector.load %arg8[%c0_22, %c0_23, %c0_24, %c0_25] : memref<1x4x8x8xf32, #tpu.memory_space<vmem>>, vector<1x1x8x8xf32>
    %41 = vector.shape_cast %40 : vector<1x1x8x8xf32> to vector<8x8xf32>
    %42 = vector.shape_cast %39 : vector<8x8xf32> to vector<1x1x8x8xf32>
    tpu.vector_store %arg8[%c0_22, %c0_23, %c0_24, %c0_25], %42 {strides = array<i32>} : memref<1x4x8x8xf32, #tpu.memory_space<vmem>>, vector<1x1x8x8xf32>,
    %43 = vector.extract_strided_slice %34 {offsets = [0, 64], sizes = [8, 8], strides = [1, 1]} : vector<8x96xf32> to vector<8x8xf32>
    %c0_26 = arith.constant 0 : index
    %c0_27 = arith.constant 0 : index
    %c0_28 = arith.constant 0 : index
    %c0_29 = arith.constant 0 : index
    %44 = vector.load %arg9[%c0_26, %c0_27, %c0_28, %c0_29] : memref<1x4x8x8xf32, #tpu.memory_space<vmem>>, vector<1x1x8x8xf32>
    %45 = vector.shape_cast %44 : vector<1x1x8x8xf32> to vector<8x8xf32>
    %46 = vector.shape_cast %43 : vector<8x8xf32> to vector<1x1x8x8xf32>
    tpu.vector_store %arg9[%c0_26, %c0_27, %c0_28, %c0_29], %46 {strides = array<i32>} : memref<1x4x8x8xf32, #tpu.memory_space<vmem>>, vector<1x1x8x8xf32>,
    %47 = vector.extract_strided_slice %34 {offsets = [0, 8], sizes = [8, 8], strides = [1, 1]} : vector<8x96xf32> to vector<8x8xf32>
    %c0_30 = arith.constant 0 : index
    %c1 = arith.constant 1 : index
    %c0_31 = arith.constant 0 : index
    %c0_32 = arith.constant 0 : index
    %48 = vector.load %arg7[%c0_30, %c1, %c0_31, %c0_32] : memref<1x4x8x8xf32, #tpu.memory_space<vmem>>, vector<1x1x8x8xf32>
    %49 = vector.shape_cast %48 : vector<1x1x8x8xf32> to vector<8x8xf32>
    %50 = vector.shape_cast %47 : vector<8x8xf32> to vector<1x1x8x8xf32>
    tpu.vector_store %arg7[%c0_30, %c1, %c0_31, %c0_32], %50 {strides = array<i32>} : memref<1x4x8x8xf32, #tpu.memory_space<vmem>>, vector<1x1x8x8xf32>,
    %51 = vector.extract_strided_slice %34 {offsets = [0, 40], sizes = [8, 8], strides = [1, 1]} : vector<8x96xf32> to vector<8x8xf32>
    %c0_33 = arith.constant 0 : index
    %c1_34 = arith.constant 1 : index
    %c0_35 = arith.constant 0 : index
    %c0_36 = arith.constant 0 : index
    %52 = vector.load %arg8[%c0_33, %c1_34, %c0_35, %c0_36] : memref<1x4x8x8xf32, #tpu.memory_space<vmem>>, vector<1x1x8x8xf32>
    %53 = vector.shape_cast %52 : vector<1x1x8x8xf32> to vector<8x8xf32>
    %54 = vector.shape_cast %51 : vector<8x8xf32> to vector<1x1x8x8xf32>
    tpu.vector_store %arg8[%c0_33, %c1_34, %c0_35, %c0_36], %54 {strides = array<i32>} : memref<1x4x8x8xf32, #tpu.memory_space<vmem>>, vector<1x1x8x8xf32>,
    %55 = vector.extract_strided_slice %34 {offsets = [0, 72], sizes = [8, 8], strides = [1, 1]} : vector<8x96xf32> to vector<8x8xf32>
    %c0_37 = arith.constant 0 : index
    %c1_38 = arith.constant 1 : index
    %c0_39 = arith.constant 0 : index
    %c0_40 = arith.constant 0 : index
    %56 = vector.load %arg9[%c0_37, %c1_38, %c0_39, %c0_40] : memref<1x4x8x8xf32, #tpu.memory_space<vmem>>, vector<1x1x8x8xf32>
    %57 = vector.shape_cast %56 : vector<1x1x8x8xf32> to vector<8x8xf32>
    %58 = vector.shape_cast %55 : vector<8x8xf32> to vector<1x1x8x8xf32>
    tpu.vector_store %arg9[%c0_37, %c1_38, %c0_39, %c0_40], %58 {strides = array<i32>} : memref<1x4x8x8xf32, #tpu.memory_space<vmem>>, vector<1x1x8x8xf32>,
    %59 = vector.extract_strided_slice %34 {offsets = [0, 16], sizes = [8, 8], strides = [1, 1]} : vector<8x96xf32> to vector<8x8xf32>
    %c0_41 = arith.constant 0 : index
    %c2 = arith.constant 2 : index
    %c0_42 = arith.constant 0 : index
    %c0_43 = arith.constant 0 : index
    %60 = vector.load %arg7[%c0_41, %c2, %c0_42, %c0_43] : memref<1x4x8x8xf32, #tpu.memory_space<vmem>>, vector<1x1x8x8xf32>
    %61 = vector.shape_cast %60 : vector<1x1x8x8xf32> to vector<8x8xf32>
    %62 = vector.shape_cast %59 : vector<8x8xf32> to vector<1x1x8x8xf32>
    tpu.vector_store %arg7[%c0_41, %c2, %c0_42, %c0_43], %62 {strides = array<i32>} : memref<1x4x8x8xf32, #tpu.memory_space<vmem>>, vector<1x1x8x8xf32>,
    %63 = vector.extract_strided_slice %34 {offsets = [0, 48], sizes = [8, 8], strides = [1, 1]} : vector<8x96xf32> to vector<8x8xf32>
    %c0_44 = arith.constant 0 : index
    %c2_45 = arith.constant 2 : index
    %c0_46 = arith.constant 0 : index
    %c0_47 = arith.constant 0 : index
    %64 = vector.load %arg8[%c0_44, %c2_45, %c0_46, %c0_47] : memref<1x4x8x8xf32, #tpu.memory_space<vmem>>, vector<1x1x8x8xf32>
    %65 = vector.shape_cast %64 : vector<1x1x8x8xf32> to vector<8x8xf32>
    %66 = vector.shape_cast %63 : vector<8x8xf32> to vector<1x1x8x8xf32>
    tpu.vector_store %arg8[%c0_44, %c2_45, %c0_46, %c0_47], %66 {strides = array<i32>} : memref<1x4x8x8xf32, #tpu.memory_space<vmem>>, vector<1x1x8x8xf32>,
    %67 = vector.extract_strided_slice %34 {offsets = [0, 80], sizes = [8, 8], strides = [1, 1]} : vector<8x96xf32> to vector<8x8xf32>
    %c0_48 = arith.constant 0 : index
    %c2_49 = arith.constant 2 : index
    %c0_50 = arith.constant 0 : index
    %c0_51 = arith.constant 0 : index
    %68 = vector.load %arg9[%c0_48, %c2_49, %c0_50, %c0_51] : memref<1x4x8x8xf32, #tpu.memory_space<vmem>>, vector<1x1x8x8xf32>
    %69 = vector.shape_cast %68 : vector<1x1x8x8xf32> to vector<8x8xf32>
    %70 = vector.shape_cast %67 : vector<8x8xf32> to vector<1x1x8x8xf32>
    tpu.vector_store %arg9[%c0_48, %c2_49, %c0_50, %c0_51], %70 {strides = array<i32>} : memref<1x4x8x8xf32, #tpu.memory_space<vmem>>, vector<1x1x8x8xf32>,
    %71 = vector.extract_strided_slice %34 {offsets = [0, 24], sizes = [8, 8], strides = [1, 1]} : vector<8x96xf32> to vector<8x8xf32>
    %c0_52 = arith.constant 0 : index
    %c3 = arith.constant 3 : index
    %c0_53 = arith.constant 0 : index
    %c0_54 = arith.constant 0 : index
    %72 = vector.load %arg7[%c0_52, %c3, %c0_53, %c0_54] : memref<1x4x8x8xf32, #tpu.memory_space<vmem>>, vector<1x1x8x8xf32>
    %73 = vector.shape_cast %72 : vector<1x1x8x8xf32> to vector<8x8xf32>
    %74 = vector.shape_cast %71 : vector<8x8xf32> to vector<1x1x8x8xf32>
    tpu.vector_store %arg7[%c0_52, %c3, %c0_53, %c0_54], %74 {strides = array<i32>} : memref<1x4x8x8xf32, #tpu.memory_space<vmem>>, vector<1x1x8x8xf32>,
    %75 = vector.extract_strided_slice %34 {offsets = [0, 56], sizes = [8, 8], strides = [1, 1]} : vector<8x96xf32> to vector<8x8xf32>
    %c0_55 = arith.constant 0 : index
    %c3_56 = arith.constant 3 : index
    %c0_57 = arith.constant 0 : index
    %c0_58 = arith.constant 0 : index
    %76 = vector.load %arg8[%c0_55, %c3_56, %c0_57, %c0_58] : memref<1x4x8x8xf32, #tpu.memory_space<vmem>>, vector<1x1x8x8xf32>
    %77 = vector.shape_cast %76 : vector<1x1x8x8xf32> to vector<8x8xf32>
    %78 = vector.shape_cast %75 : vector<8x8xf32> to vector<1x1x8x8xf32>
    tpu.vector_store %arg8[%c0_55, %c3_56, %c0_57, %c0_58], %78 {strides = array<i32>} : memref<1x4x8x8xf32, #tpu.memory_space<vmem>>, vector<1x1x8x8xf32>,
    %79 = vector.extract_strided_slice %34 {offsets = [0, 88], sizes = [8, 8], strides = [1, 1]} : vector<8x96xf32> to vector<8x8xf32>
    %c0_59 = arith.constant 0 : index
    %c3_60 = arith.constant 3 : index
    %c0_61 = arith.constant 0 : index
    %c0_62 = arith.constant 0 : index
    %80 = vector.load %arg9[%c0_59, %c3_60, %c0_61, %c0_62] : memref<1x4x8x8xf32, #tpu.memory_space<vmem>>, vector<1x1x8x8xf32>
    %81 = vector.shape_cast %80 : vector<1x1x8x8xf32> to vector<8x8xf32>
    %82 = vector.shape_cast %79 : vector<8x8xf32> to vector<1x1x8x8xf32>
    tpu.vector_store %arg9[%c0_59, %c3_60, %c0_61, %c0_62], %82 {strides = array<i32>} : memref<1x4x8x8xf32, #tpu.memory_space<vmem>>, vector<1x1x8x8xf32>,
    return
  }
  func.func @transform_0(%arg0: i32, %arg1: i32) -> (i32, i32, i32) {
    %c0_i32 = arith.constant 0 : i32
    %c0_i32_0 = arith.constant 0 : i32
    return %arg0, %arg1, %c0_i32 : i32, i32, i32
  }
  func.func @transform_1(%arg0: i32, %arg1: i32) -> (i32, i32, i32) {
    %c0_i32 = arith.constant 0 : i32
    %c0_i32_0 = arith.constant 0 : i32
    %c0_i32_1 = arith.constant 0 : i32
    return %arg0, %c0_i32, %c0_i32_0 : i32, i32, i32
  }
  func.func @transform_2(%arg0: i32, %arg1: i32) -> (i32, i32, i32) {
    %c0_i32 = arith.constant 0 : i32
    %c0_i32_0 = arith.constant 0 : i32
    %c0_i32_1 = arith.constant 0 : i32
    return %arg0, %c0_i32, %c0_i32_0 : i32, i32, i32
  }
  func.func @transform_3(%arg0: i32, %arg1: i32) -> (i32, i32) {
    %c0_i32 = arith.constant 0 : i32
    %c0_i32_0 = arith.constant 0 : i32
    %c0_i32_1 = arith.constant 0 : i32
    return %c0_i32, %c0_i32_0 : i32, i32
  }
  func.func @transform_4(%arg0: i32, %arg1: i32) -> (i32, i32) {
    %c0_i32 = arith.constant 0 : i32
    %c0_i32_0 = arith.constant 0 : i32
    %c0_i32_1 = arith.constant 0 : i32
    return %c0_i32, %c0_i32_0 : i32, i32
  }
  func.func @transform_5(%arg0: i32, %arg1: i32) -> (i32, i32, i32, i32) {
    %c0_i32 = arith.constant 0 : i32
    %c0_i32_0 = arith.constant 0 : i32
    %c0_i32_1 = arith.constant 0 : i32
    return %arg0, %c0_i32, %arg1, %c0_i32_0 : i32, i32, i32, i32
  }
  func.func @transform_6(%arg0: i32, %arg1: i32) -> (i32, i32, i32, i32) {
    %c0_i32 = arith.constant 0 : i32
    %c0_i32_0 = arith.constant 0 : i32
    %c0_i32_1 = arith.constant 0 : i32
    return %arg0, %c0_i32, %arg1, %c0_i32_0 : i32, i32, i32, i32
  }
  func.func @transform_7(%arg0: i32, %arg1: i32) -> (i32, i32, i32, i32) {
    %c0_i32 = arith.constant 0 : i32
    %c0_i32_0 = arith.constant 0 : i32
    %c0_i32_1 = arith.constant 0 : i32
    return %arg0, %c0_i32, %arg1, %c0_i32_0 : i32, i32, i32, i32
  }
}

module attributes {stable_mosaic.version = 11 : i64} {
  func.func @qkv_kernel(%arg0: i32, %arg1: i32, %arg2: memref<1x8x32xf32, #tpu.memory_space<vmem>>, %arg3: memref<1x1x32xf32, #tpu.memory_space<vmem>>, %arg4: memref<1x1x32xf32, #tpu.memory_space<vmem>>, %arg5: memref<32x96xf32, #tpu.memory_space<vmem>>, %arg6: memref<1x96xf32, #tpu.memory_space<vmem>>, %arg7: memref<1x4x8x8xf32, #tpu.memory_space<vmem>>, %arg8: memref<1x4x8x8xf32, #tpu.memory_space<vmem>>, %arg9: memref<1x4x8x8xf32, #tpu.memory_space<vmem>>) attributes {dimension_semantics = [#tpu.dimension_semantics<parallel>, #tpu.dimension_semantics<parallel>], iteration_bounds = array<i64: 2, 1>, scalar_prefetch = 0 : i64, scratch_operands = 0 : i64, tpu.core_type = #tpu.core_type<tc>, window_params = [{transform_indices = @transform_0, window_bounds = array<i64: 1, 8, 32>}, {transform_indices = @transform_1, window_bounds = array<i64: 1, 1, 32>}, {transform_indices = @transform_2, window_bounds = array<i64: 1, 1, 32>}, {pipeline_mode = #tpu.pipeline_mode<synchronous>, transform_indices = @transform_3, window_bounds = array<i64: 32, 96>}, {pipeline_mode = #tpu.pipeline_mode<synchronous>, transform_indices = @transform_4, window_bounds = array<i64: 1, 96>}, {transform_indices = @transform_5, window_bounds = array<i64: 1, 4, 8, 8>}, {transform_indices = @transform_6, window_bounds = array<i64: 1, 4, 8, 8>}, {transform_indices = @transform_7, window_bounds = array<i64: 1, 4, 8, 8>}]} {
    %c0 = arith.constant 0 : index
    %c0_0 = arith.constant 0 : index
    %c0_1 = arith.constant 0 : index
    %0 = vector.load %arg2[%c0, %c0_0, %c0_1] : memref<1x8x32xf32, #tpu.memory_space<vmem>>, vector<1x8x32xf32>
    %1 = vector.shape_cast %0 : vector<1x8x32xf32> to vector<8x32xf32>
    %cst = arith.constant dense<0.000000e+00> : vector<8xf32>
    %2 = vector.multi_reduction <add>, %1, %cst [1] : vector<8x32xf32> to vector<8xf32>
    %3 = vector.shape_cast %2 : vector<8xf32> to vector<8x1xf32>
    %cst_2 = arith.constant 3.200000e+01 : f32
    %4 = vector.broadcast %cst_2 : f32 to vector<8x1xf32>
    %5 = arith.divf %3, %4 : vector<8x1xf32>
    %6 = vector.broadcast %5 : vector<8x1xf32> to vector<8x32xf32>
    %7 = arith.subf %1, %6 : vector<8x32xf32>
    %8 = arith.mulf %7, %7 : vector<8x32xf32>
    %cst_3 = arith.constant dense<0.000000e+00> : vector<8xf32>
    %9 = vector.multi_reduction <add>, %8, %cst_3 [1] : vector<8x32xf32> to vector<8xf32>
    %10 = vector.shape_cast %9 : vector<8xf32> to vector<8x1xf32>
    %cst_4 = arith.constant 3.200000e+01 : f32
    %11 = vector.broadcast %cst_4 : f32 to vector<8x1xf32>
    %12 = arith.divf %10, %11 : vector<8x1xf32>
    %13 = vector.broadcast %5 : vector<8x1xf32> to vector<8x32xf32>
    %14 = arith.subf %1, %13 : vector<8x32xf32>
    %cst_5 = arith.constant 9.99999997E-7 : f32
    %15 = vector.broadcast %cst_5 : f32 to vector<8x1xf32>
    %16 = arith.addf %12, %15 : vector<8x1xf32>
    %17 = math.rsqrt %16 : vector<8x1xf32>
    %18 = vector.broadcast %17 : vector<8x1xf32> to vector<8x32xf32>
    %19 = arith.mulf %14, %18 : vector<8x32xf32>
    %c0_6 = arith.constant 0 : index
    %c0_7 = arith.constant 0 : index
    %c0_8 = arith.constant 0 : index
    %20 = vector.load %arg4[%c0_6, %c0_7, %c0_8] : memref<1x1x32xf32, #tpu.memory_space<vmem>>, vector<1x1x32xf32>
    %21 = vector.shape_cast %20 : vector<1x1x32xf32> to vector<1x32xf32>
    %cst_9 = arith.constant 1.000000e+00 : f32
    %22 = vector.broadcast %cst_9 : f32 to vector<1x32xf32>
    %23 = arith.addf %22, %21 : vector<1x32xf32>
    %24 = vector.broadcast %23 : vector<1x32xf32> to vector<8x32xf32>
    %25 = arith.mulf %19, %24 : vector<8x32xf32>
    %c0_10 = arith.constant 0 : index
    %c0_11 = arith.constant 0 : index
    %c0_12 = arith.constant 0 : index
    %26 = vector.load %arg3[%c0_10, %c0_11, %c0_12] : memref<1x1x32xf32, #tpu.memory_space<vmem>>, vector<1x1x32xf32>
    %27 = vector.shape_cast %26 : vector<1x1x32xf32> to vector<1x32xf32>
    %28 = vector.broadcast %27 : vector<1x32xf32> to vector<8x32xf32>
    %29 = arith.addf %25, %28 : vector<8x32xf32>
    %c0_13 = arith.constant 0 : index
    %c0_14 = arith.constant 0 : index
    %30 = vector.load %arg5[%c0_13, %c0_14] : memref<32x96xf32, #tpu.memory_space<vmem>>, vector<32x96xf32>
    %cst_15 = arith.constant dense<0.000000e+00> : vector<8x96xf32>
    %31 = tpu.matmul %29, %30, %cst_15 {dimension_numbers = #tpu.dot_dimension_numbers<[1], [0], [0], [1], [0, 0, 1, 1], [], []>} : vector<8x32xf32>, vector<32x96xf32>, vector<8x96xf32> -> vector<8x96xf32>
    %c0_16 = arith.constant 0 : index
    %c0_17 = arith.constant 0 : index
    %32 = vector.load %arg6[%c0_16, %c0_17] : memref<1x96xf32, #tpu.memory_space<vmem>>, vector<1x96xf32>
    %33 = vector.broadcast %32 : vector<1x96xf32> to vector<8x96xf32>
    %34 = arith.addf %31, %33 : vector<8x96xf32>
    %35 = vector.extract_strided_slice %34 {offsets = [0, 0], sizes = [8, 8], strides = [1, 1]} : vector<8x96xf32> to vector<8x8xf32>
    %c0_18 = arith.constant 0 : index
    %c0_19 = arith.constant 0 : index
    %c0_20 = arith.constant 0 : index
    %c0_21 = arith.constant 0 : index
    %36 = vector.load %arg7[%c0_18, %c0_19, %c0_20, %c0_21] : memref<1x4x8x8xf32, #tpu.memory_space<vmem>>, vector<1x1x8x8xf32>
    %37 = vector.shape_cast %36 : vector<1x1x8x8xf32> to vector<8x8xf32>
    %38 = vector.shape_cast %35 : vector<8x8xf32> to vector<1x1x8x8xf32>
    tpu.vector_store %arg7[%c0_18, %c0_19, %c0_20, %c0_21], %38 {strides = array<i32>} : memref<1x4x8x8xf32, #tpu.memory_space<vmem>>, vector<1x1x8x8xf32>,
    %39 = vector.extract_strided_slice %34 {offsets = [0, 32], sizes = [8, 8], strides = [1, 1]} : vector<8x96xf32> to vector<8x8xf32>
    %c0_22 = arith.constant 0 : index
    %c0_23 = arith.constant 0 : index
    %c0_24 = arith.constant 0 : index
    %c0_25 = arith.constant 0 : index
    %40 = vector.load %arg8[%c0_22, %c0_23, %c0_24, %c0_25] : memref<1x4x8x8xf32, #tpu.memory_space<vmem>>, vector<1x1x8x8xf32>
    %41 = vector.shape_cast %40 : vector<1x1x8x8xf32> to vector<8x8xf32>
    %42 = vector.shape_cast %39 : vector<8x8xf32> to vector<1x1x8x8xf32>
    tpu.vector_store %arg8[%c0_22, %c0_23, %c0_24, %c0_25], %42 {strides = array<i32>} : memref<1x4x8x8xf32, #tpu.memory_space<vmem>>, vector<1x1x8x8xf32>,
    %43 = vector.extract_strided_slice %34 {offsets = [0, 64], sizes = [8, 8], strides = [1, 1]} : vector<8x96xf32> to vector<8x8xf32>
    %c0_26 = arith.constant 0 : index
    %c0_27 = arith.constant 0 : index
    %c0_28 = arith.constant 0 : index
    %c0_29 = arith.constant 0 : index
    %44 = vector.load %arg9[%c0_26, %c0_27, %c0_28, %c0_29] : memref<1x4x8x8xf32, #tpu.memory_space<vmem>>, vector<1x1x8x8xf32>
    %45 = vector.shape_cast %44 : vector<1x1x8x8xf32> to vector<8x8xf32>
    %46 = vector.shape_cast %43 : vector<8x8xf32> to vector<1x1x8x8xf32>
    tpu.vector_store %arg9[%c0_26, %c0_27, %c0_28, %c0_29], %46 {strides = array<i32>} : memref<1x4x8x8xf32, #tpu.memory_space<vmem>>, vector<1x1x8x8xf32>,
    %47 = vector.extract_strided_slice %34 {offsets = [0, 8], sizes = [8, 8], strides = [1, 1]} : vector<8x96xf32> to vector<8x8xf32>
    %c0_30 = arith.constant 0 : index
    %c1 = arith.constant 1 : index
    %c0_31 = arith.constant 0 : index
    %c0_32 = arith.constant 0 : index
    %48 = vector.load %arg7[%c0_30, %c1, %c0_31, %c0_32] : memref<1x4x8x8xf32, #tpu.memory_space<vmem>>, vector<1x1x8x8xf32>
    %49 = vector.shape_cast %48 : vector<1x1x8x8xf32> to vector<8x8xf32>
    %50 = vector.shape_cast %47 : vector<8x8xf32> to vector<1x1x8x8xf32>
    tpu.vector_store %arg7[%c0_30, %c1, %c0_31, %c0_32], %50 {strides = array<i32>} : memref<1x4x8x8xf32, #tpu.memory_space<vmem>>, vector<1x1x8x8xf32>,
    %51 = vector.extract_strided_slice %34 {offsets = [0, 40], sizes = [8, 8], strides = [1, 1]} : vector<8x96xf32> to vector<8x8xf32>
    %c0_33 = arith.constant 0 : index
    %c1_34 = arith.constant 1 : index
    %c0_35 = arith.constant 0 : index
    %c0_36 = arith.constant 0 : index
    %52 = vector.load %arg8[%c0_33, %c1_34, %c0_35, %c0_36] : memref<1x4x8x8xf32, #tpu.memory_space<vmem>>, vector<1x1x8x8xf32>
    %53 = vector.shape_cast %52 : vector<1x1x8x8xf32> to vector<8x8xf32>
    %54 = vector.shape_cast %51 : vector<8x8xf32> to vector<1x1x8x8xf32>
    tpu.vector_store %arg8[%c0_33, %c1_34, %c0_35, %c0_36], %54 {strides = array<i32>} : memref<1x4x8x8xf32, #tpu.memory_space<vmem>>, vector<1x1x8x8xf32>,
    %55 = vector.extract_strided_slice %34 {offsets = [0, 72], sizes = [8, 8], strides = [1, 1]} : vector<8x96xf32> to vector<8x8xf32>
    %c0_37 = arith.constant 0 : index
    %c1_38 = arith.constant 1 : index
    %c0_39 = arith.constant 0 : index
    %c0_40 = arith.constant 0 : index
    %56 = vector.load %arg9[%c0_37, %c1_38, %c0_39, %c0_40] : memref<1x4x8x8xf32, #tpu.memory_space<vmem>>, vector<1x1x8x8xf32>
    %57 = vector.shape_cast %56 : vector<1x1x8x8xf32> to vector<8x8xf32>
    %58 = vector.shape_cast %55 : vector<8x8xf32> to vector<1x1x8x8xf32>
    tpu.vector_store %arg9[%c0_37, %c1_38, %c0_39, %c0_40], %58 {strides = array<i32>} : memref<1x4x8x8xf32, #tpu.memory_space<vmem>>, vector<1x1x8x8xf32>,
    %59 = vector.extract_strided_slice %34 {offsets = [0, 16], sizes = [8, 8], strides = [1, 1]} : vector<8x96xf32> to vector<8x8xf32>
    %c0_41 = arith.constant 0 : index
    %c2 = arith.constant 2 : index
    %c0_42 = arith.constant 0 : index
    %c0_43 = arith.constant 0 : index
    %60 = vector.load %arg7[%c0_41, %c2, %c0_42, %c0_43] : memref<1x4x8x8xf32, #tpu.memory_space<vmem>>, vector<1x1x8x8xf32>
    %61 = vector.shape_cast %60 : vector<1x1x8x8xf32> to vector<8x8xf32>
    %62 = vector.shape_cast %59 : vector<8x8xf32> to vector<1x1x8x8xf32>
    tpu.vector_store %arg7[%c0_41, %c2, %c0_42, %c0_43], %62 {strides = array<i32>} : memref<1x4x8x8xf32, #tpu.memory_space<vmem>>, vector<1x1x8x8xf32>,
    %63 = vector.extract_strided_slice %34 {offsets = [0, 48], sizes = [8, 8], strides = [1, 1]} : vector<8x96xf32> to vector<8x8xf32>
    %c0_44 = arith.constant 0 : index
    %c2_45 = arith.constant 2 : index
    %c0_46 = arith.constant 0 : index
    %c0_47 = arith.constant 0 : index
    %64 = vector.load %arg8[%c0_44, %c2_45, %c0_46, %c0_47] : memref<1x4x8x8xf32, #tpu.memory_space<vmem>>, vector<1x1x8x8xf32>
    %65 = vector.shape_cast %64 : vector<1x1x8x8xf32> to vector<8x8xf32>
    %66 = vector.shape_cast %63 : vector<8x8xf32> to vector<1x1x8x8xf32>
    tpu.vector_store %arg8[%c0_44, %c2_45, %c0_46, %c0_47], %66 {strides = array<i32>} : memref<1x4x8x8xf32, #tpu.memory_space<vmem>>, vector<1x1x8x8xf32>,
    %67 = vector.extract_strided_slice %34 {offsets = [0, 80], sizes = [8, 8], strides = [1, 1]} : vector<8x96xf32> to vector<8x8xf32>
    %c0_48 = arith.constant 0 : index
    %c2_49 = arith.constant 2 : index
    %c0_50 = arith.constant 0 : index
    %c0_51 = arith.constant 0 : index
    %68 = vector.load %arg9[%c0_48, %c2_49, %c0_50, %c0_51] : memref<1x4x8x8xf32, #tpu.memory_space<vmem>>, vector<1x1x8x8xf32>
    %69 = vector.shape_cast %68 : vector<1x1x8x8xf32> to vector<8x8xf32>
    %70 = vector.shape_cast %67 : vector<8x8xf32> to vector<1x1x8x8xf32>
    tpu.vector_store %arg9[%c0_48, %c2_49, %c0_50, %c0_51], %70 {strides = array<i32>} : memref<1x4x8x8xf32, #tpu.memory_space<vmem>>, vector<1x1x8x8xf32>,
    %71 = vector.extract_strided_slice %34 {offsets = [0, 24], sizes = [8, 8], strides = [1, 1]} : vector<8x96xf32> to vector<8x8xf32>
    %c0_52 = arith.constant 0 : index
    %c3 = arith.constant 3 : index
    %c0_53 = arith.constant 0 : index
    %c0_54 = arith.constant 0 : index
    %72 = vector.load %arg7[%c0_52, %c3, %c0_53, %c0_54] : memref<1x4x8x8xf32, #tpu.memory_space<vmem>>, vector<1x1x8x8xf32>
    %73 = vector.shape_cast %72 : vector<1x1x8x8xf32> to vector<8x8xf32>
    %74 = vector.shape_cast %71 : vector<8x8xf32> to vector<1x1x8x8xf32>
    tpu.vector_store %arg7[%c0_52, %c3, %c0_53, %c0_54], %74 {strides = array<i32>} : memref<1x4x8x8xf32, #tpu.memory_space<vmem>>, vector<1x1x8x8xf32>,
    %75 = vector.extract_strided_slice %34 {offsets = [0, 56], sizes = [8, 8], strides = [1, 1]} : vector<8x96xf32> to vector<8x8xf32>
    %c0_55 = arith.constant 0 : index
    %c3_56 = arith.constant 3 : index
    %c0_57 = arith.constant 0 : index
    %c0_58 = arith.constant 0 : index
    %76 = vector.load %arg8[%c0_55, %c3_56, %c0_57, %c0_58] : memref<1x4x8x8xf32, #tpu.memory_space<vmem>>, vector<1x1x8x8xf32>
    %77 = vector.shape_cast %76 : vector<1x1x8x8xf32> to vector<8x8xf32>
    %78 = vector.shape_cast %75 : vector<8x8xf32> to vector<1x1x8x8xf32>
    tpu.vector_store %arg8[%c0_55, %c3_56, %c0_57, %c0_58], %78 {strides = array<i32>} : memref<1x4x8x8xf32, #tpu.memory_space<vmem>>, vector<1x1x8x8xf32>,
    %79 = vector.extract_strided_slice %34 {offsets = [0, 88], sizes = [8, 8], strides = [1, 1]} : vector<8x96xf32> to vector<8x8xf32>
    %c0_59 = arith.constant 0 : index
    %c3_60 = arith.constant 3 : index
    %c0_61 = arith.constant 0 : index
    %c0_62 = arith.constant 0 : index
    %80 = vector.load %arg9[%c0_59, %c3_60, %c0_61, %c0_62] : memref<1x4x8x8xf32, #tpu.memory_space<vmem>>, vector<1x1x8x8xf32>
    %81 = vector.shape_cast %80 : vector<1x1x8x8xf32> to vector<8x8xf32>
    %82 = vector.shape_cast %79 : vector<8x8xf32> to vector<1x1x8x8xf32>
    tpu.vector_store %arg9[%c0_59, %c3_60, %c0_61, %c0_62], %82 {strides = array<i32>} : memref<1x4x8x8xf32, #tpu.memory_space<vmem>>, vector<1x1x8x8xf32>,
    return
  }
  func.func @transform_0(%arg0: i32, %arg1: i32) -> (i32, i32, i32) {
    %c0_i32 = arith.constant 0 : i32
    %c0_i32_0 = arith.constant 0 : i32
    return %arg0, %arg1, %c0_i32 : i32, i32, i32
  }
  func.func @transform_1(%arg0: i32, %arg1: i32) -> (i32, i32, i32) {
    %c0_i32 = arith.constant 0 : i32
    %c0_i32_0 = arith.constant 0 : i32
    %c0_i32_1 = arith.constant 0 : i32
    return %arg0, %c0_i32, %c0_i32_0 : i32, i32, i32
  }
  func.func @transform_2(%arg0: i32, %arg1: i32) -> (i32, i32, i32) {
    %c0_i32 = arith.constant 0 : i32
    %c0_i32_0 = arith.constant 0 : i32
    %c0_i32_1 = arith.constant 0 : i32
    return %arg0, %c0_i32, %c0_i32_0 : i32, i32, i32
  }
  func.func @transform_3(%arg0: i32, %arg1: i32) -> (i32, i32) {
    %c0_i32 = arith.constant 0 : i32
    %c0_i32_0 = arith.constant 0 : i32
    %c0_i32_1 = arith.constant 0 : i32
    return %c0_i32, %c0_i32_0 : i32, i32
  }
  func.func @transform_4(%arg0: i32, %arg1: i32) -> (i32, i32) {
    %c0_i32 = arith.constant 0 : i32
    %c0_i32_0 = arith.constant 0 : i32
    %c0_i32_1 = arith.constant 0 : i32
    return %c0_i32, %c0_i32_0 : i32, i32
  }
  func.func @transform_5(%arg0: i32, %arg1: i32) -> (i32, i32, i32, i32) {
    %c0_i32 = arith.constant 0 : i32
    %c0_i32_0 = arith.constant 0 : i32
    %c0_i32_1 = arith.constant 0 : i32
    return %arg0, %c0_i32, %arg1, %c0_i32_0 : i32, i32, i32, i32
  }
  func.func @transform_6(%arg0: i32, %arg1: i32) -> (i32, i32, i32, i32) {
    %c0_i32 = arith.constant 0 : i32
    %c0_i32_0 = arith.constant 0 : i32
    %c0_i32_1 = arith.constant 0 : i32
    return %arg0, %c0_i32, %arg1, %c0_i32_0 : i32, i32, i32, i32
  }
  func.func @transform_7(%arg0: i32, %arg1: i32) -> (i32, i32, i32, i32) {
    %c0_i32 = arith.constant 0 : i32
    %c0_i32_0 = arith.constant 0 : i32
    %c0_i32_1 = arith.constant 0 : i32
    return %arg0, %c0_i32, %arg1, %c0_i32_0 : i32, i32, i32, i32
  }
}

</mosaic_0001>

<llo_original>
// kernel: tpu_custom_call.1
$region0: #{tpu_custom_call.1}
  #allocation0 [shape = 'u32[]', space=smem, size = 0x4, offset = 0x4, fixed_abs, tag = 'smem constant byte address 0x4 - core index']
  #allocation1 [shape = 'u32[144,128]{1,0:T(1,128)}', space=vmem, size = 0x12000, scoped, tag = 'internal scratch']
  %s0 = inlined_call_operand.hbm [shape: f32[2,8,32], index: 0, kind: input, shape index: {}]
  %s1 = inlined_call_operand.hbm [shape: f32[2,1,32], index: 1, kind: input, shape index: {}]
  %s2 = inlined_call_operand.hbm [shape: f32[2,1,32], index: 2, kind: input, shape index: {}]
  %s3 = inlined_call_operand.hbm [shape: f32[32,96], index: 3, kind: input, shape index: {}]
  %s4 = inlined_call_operand.hbm [shape: f32[1,96], index: 4, kind: input, shape index: {}]
  %s5 = inlined_call_operand.hbm [shape: f32[2,4,8,8], index: 5, kind: output, shape index: {0}]
  %s6 = inlined_call_operand.hbm [shape: f32[2,4,8,8], index: 6, kind: output, shape index: {1}]
  %s7 = inlined_call_operand.hbm [shape: f32[2,4,8,8], index: 7, kind: output, shape index: {2}]
  %8 = xla_tuple %s5, %s6, %s7
  %s9 = sld [smem:[#allocation0]]
  $region89: #{tpu_custom_call.1} parent=0
    _
  %s11 = ssub.s32 1, %s9
  %s12 = scalar_select 0, %s11, %s9
  $region1: #{tpu_custom_call.1} parent=0
    #allocation2 [shape = 'u8[8192]{0}', space=vmem, size = 0x2000, scoped, tag = 'input window, operand 0']
    #allocation3 [shape = 's32[2]{0}', space=sflag, size = 0x8, scoped, tag = 'scoped memory for tpu_custom_call.1']
    #allocation4 [shape = 's32[2]{0}', space=sflag, size = 0x8, scoped, tag = 'scoped memory for tpu_custom_call.1']
    #allocation5 [shape = 'u8[1024]{0}', space=vmem, size = 0x400, scoped, tag = 'input window, operand 1']
    #allocation6 [shape = 's32[2]{0}', space=sflag, size = 0x8, scoped, tag = 'scoped memory for tpu_custom_call.1']
    #allocation7 [shape = 'u8[1024]{0}', space=vmem, size = 0x400, scoped, tag = 'input window, operand 2']
    #allocation8 [shape = 'u8[16384]{0}', space=vmem, size = 0x4000, scoped, tag = 'input window, operand 3, single buffered']
    #allocation9 [shape = 's32[1]{0}', space=sflag, size = 0x4, scoped, tag = 'scoped memory for tpu_custom_call.1']
    #allocation10 [shape = 'u8[512]{0}', space=vmem, size = 0x400, scoped, tag = 'input window, operand 4, single buffered']
    #allocation11 [shape = 'u8[32768]{0}', space=vmem, size = 0x8000, scoped, tag = 'output window, operand 0']
    #allocation12 [shape = 'u8[32768]{0}', space=vmem, size = 0x8000, scoped, tag = 'output window, operand 1']
    #allocation13 [shape = 's32[2]{0}', space=sflag, size = 0x8, scoped, tag = 'scoped memory for tpu_custom_call.1']
    #allocation14 [shape = 'u8[32768]{0}', space=vmem, size = 0x8000, scoped, tag = 'output window, operand 2']
    %13 = vsyncpa [#allocation3], 0
    %s14 = scalar_lea.sflag [#allocation3], 1
    %15 = vsyncpa %s14, 0
    %16 = vsyncpa [#allocation6], 0
    %s17 = scalar_lea.sflag [#allocation6], 1
    %18 = vsyncpa %s17, 0
    %19 = vsyncpa [#allocation9], 0
    %20 = vsyncpa [#allocation4], 0
    %s21 = scalar_lea.sflag [#allocation4], 1
    %22 = vsyncpa %s21, 0
    %23 = vsyncpa [#allocation13], 0
    %s24 = scalar_lea.sflag [#allocation13], 1
    %25 = vsyncpa %s24, 0
    loop: start=0, step=1, limit=4
    $region2: #{tpu_custom_call.1} parent=1 // loop_pre_header
      _
    $region3: #{tpu_custom_call.1} parent=1 // loop_header
      %s27 = sphi 0, %s31
      %p28 = scmp.ge.s32.totalorder %s27, 4
      %s34 = sphi 0, %s46
      %s35 = sphi 0, %s42
      %s36 = sphi 0, %s34
      %s37 = sphi 0, %s35
      %s38 = sphi 0, %s36
      %s39 = sphi 0, %s37
      %s51 = sphi 0, %s53
      %s54 = sphi 0, %s51
      %s55 = sphi 0, %s54
      %s71 = sphi 0, %s55
      %s77 = sphi 0, %s79
      %s80 = sphi 0, %s77
      %s81 = sphi 0, %s80
      %s97 = sphi 0, %s81
      %s103 = sphi 0, %s105
      %s106 = sphi 0, %s103
      %s107 = sphi 0, %s106
      %s123 = sphi 0, %s107
      %s127 = sphi 0, %s127
      %s129 = sphi 0, %s127
      %s130 = sphi 0, %s129
      %s144 = sphi 0, %s130
      %s148 = sphi 0, %s148
      %s150 = sphi 0, %s148
      %s151 = sphi 0, %s150
      %s165 = sphi 0, %s151
      %s173 = sphi 0, %s175
      %s176 = sphi 0, %s173
      %s177 = sphi 0, %s176
      %s193 = sphi 0, %s177
      %s201 = sphi 0, %s203
      %s204 = sphi 0, %s201
      %s205 = sphi 0, %s204
      %s221 = sphi 0, %s205
      %s229 = sphi 0, %s231
      %s232 = sphi 0, %s229
      %s233 = sphi 0, %s232
      %s249 = sphi 0, %s233
    $region4: #{tpu_custom_call.1} parent=1 // loop_header_branch
      %30 = sbr.rel (%p28) target = $region8
    $region5: #{tpu_custom_call.1} parent=1 // loop_body
      %s32 = ssub.s32 %s27, 1
      %s33 = ssub.s32 %s27, 2
      %s40 = sadd.s32 1, %s35
      %p41 = scmp.ge.s32.totalorder %s40, 1
      %s42 = scalar_select %p41, 0, %s40
      %s43 = sadd.s32 1, %s34
      %s44 = scalar_select %p41, %s43, %s34
      %p45 = scmp.ge.s32.totalorder %s44, 2
      %s46 = scalar_select %p45, 0, %s44
      %s47 = ssub.s32 %s34, %s46
      %s48 = ssub.s32 %s35, %s42
      %s49 = sor.u32 %s47, %s48
      %p50 = scmp.eq.s32.totalorder %s49, 0
      %s52 = sadd.s32 %s51, 1
      %s53 = scalar_select %p50, %s51, %s52
      %p56 = pneg %p50
      %p57 = scmp.eq.s32.totalorder %s27, 1
      %p58 = por %p56, %p57
      %p59 = scmp.ne.s32.totalorder %s51, %s54
      %p60 = scmp.eq.s32.totalorder %s27, 0
      %p61 = por %p59, %p60
      %p62 = scmp.ne.s32.totalorder %s51, %s54
      %p63 = scmp.eq.s32.totalorder %s32, 1
      %p64 = por %p62, %p63
      %p65 = scmp.ne.s32.totalorder %s54, %s55
      %p66 = scmp.eq.s32.totalorder %s32, 0
      %p67 = por %p65, %p66
      %p68 = scmp.ne.s32.totalorder %s54, %s55
      %p69 = scmp.eq.s32.totalorder %s33, 1
      %p70 = por %p68, %p69
      %p72 = scmp.ne.s32.totalorder %s55, %s71
      %p73 = scmp.eq.s32.totalorder %s33, 0
      %p74 = por %p72, %p73
      %s75 = ssub.s32 %s34, %s46
      %p76 = scmp.eq.s32.totalorder %s75, 0
      %s78 = sadd.s32 %s77, 1
      %s79 = scalar_select %p76, %s77, %s78
      %p82 = pneg %p76
      %p83 = scmp.eq.s32.totalorder %s27, 1
      %p84 = por %p82, %p83
      %p85 = scmp.ne.s32.totalorder %s77, %s80
      %p86 = scmp.eq.s32.totalorder %s27, 0
      %p87 = por %p85, %p86
      %p88 = scmp.ne.s32.totalorder %s77, %s80
      %p89 = scmp.eq.s32.totalorder %s32, 1
      %p90 = por %p88, %p89
      %p91 = scmp.ne.s32.totalorder %s80, %s81
      %p92 = scmp.eq.s32.totalorder %s32, 0
      %p93 = por %p91, %p92
      %p94 = scmp.ne.s32.totalorder %s80, %s81
      %p95 = scmp.eq.s32.totalorder %s33, 1
      %p96 = por %p94, %p95
      %p98 = scmp.ne.s32.totalorder %s81, %s97
      %p99 = scmp.eq.s32.totalorder %s33, 0
      %p100 = por %p98, %p99
      %s101 = ssub.s32 %s34, %s46
      %p102 = scmp.eq.s32.totalorder %s101, 0
      %s104 = sadd.s32 %s103, 1
      %s105 = scalar_select %p102, %s103, %s104
      %p108 = pneg %p102
      %p109 = scmp.eq.s32.totalorder %s27, 1
      %p110 = por %p108, %p109
      %p111 = scmp.ne.s32.totalorder %s103, %s106
      %p112 = scmp.eq.s32.totalorder %s27, 0
      %p113 = por %p111, %p112
      %p114 = scmp.ne.s32.totalorder %s103, %s106
      %p115 = scmp.eq.s32.totalorder %s32, 1
      %p116 = por %p114, %p115
      %p117 = scmp.ne.s32.totalorder %s106, %s107
      %p118 = scmp.eq.s32.totalorder %s32, 0
      %p119 = por %p117, %p118
      %p120 = scmp.ne.s32.totalorder %s106, %s107
      %p121 = scmp.eq.s32.totalorder %s33, 1
      %p122 = por %p120, %p121
      %p124 = scmp.ne.s32.totalorder %s107, %s123
      %p125 = scmp.eq.s32.totalorder %s33, 0
      %p126 = por %p124, %p125
      %s128 = sadd.s32 %s127, 1
      %p131 = scmp.eq.s32.totalorder %s27, 1
      %p132 = scmp.ne.s32.totalorder %s127, %s129
      %p133 = scmp.eq.s32.totalorder %s27, 0
      %p134 = por %p132, %p133
      %p135 = scmp.ne.s32.totalorder %s127, %s129
      %p136 = scmp.eq.s32.totalorder %s32, 1
      %p137 = por %p135, %p136
      %p138 = scmp.ne.s32.totalorder %s129, %s130
      %p139 = scmp.eq.s32.totalorder %s32, 0
      %p140 = por %p138, %p139
      %p141 = scmp.ne.s32.totalorder %s129, %s130
      %p142 = scmp.eq.s32.totalorder %s33, 1
      %p143 = por %p141, %p142
      %p145 = scmp.ne.s32.totalorder %s130, %s144
      %p146 = scmp.eq.s32.totalorder %s33, 0
      %p147 = por %p145, %p146
      %s149 = sadd.s32 %s148, 1
      %p152 = scmp.eq.s32.totalorder %s27, 1
      %p153 = scmp.ne.s32.totalorder %s148, %s150
      %p154 = scmp.eq.s32.totalorder %s27, 0
      %p155 = por %p153, %p154
      %p156 = scmp.ne.s32.totalorder %s148, %s150
      %p157 = scmp.eq.s32.totalorder %s32, 1
      %p158 = por %p156, %p157
      %p159 = scmp.ne.s32.totalorder %s150, %s151
      %p160 = scmp.eq.s32.totalorder %s32, 0
      %p161 = por %p159, %p160
      %p162 = scmp.ne.s32.totalorder %s150, %s151
      %p163 = scmp.eq.s32.totalorder %s33, 1
      %p164 = por %p162, %p163
      %p166 = scmp.ne.s32.totalorder %s151, %s165
      %p167 = scmp.eq.s32.totalorder %s33, 0
      %p168 = por %p166, %p167
      %s169 = ssub.s32 %s34, %s46
      %s170 = ssub.s32 %s35, %s42
      %s171 = sor.u32 %s169, %s170
      %p172 = scmp.eq.s32.totalorder %s171, 0
      %s174 = sadd.s32 %s173, 1
      %s175 = scalar_select %p172, %s173, %s174
      %p178 = pneg %p172
      %p179 = scmp.eq.s32.totalorder %s27, 1
      %p180 = por %p178, %p179
      %p181 = scmp.ne.s32.totalorder %s173, %s176
      %p182 = scmp.eq.s32.totalorder %s27, 0
      %p183 = por %p181, %p182
      %p184 = scmp.ne.s32.totalorder %s173, %s176
      %p185 = scmp.eq.s32.totalorder %s32, 1
      %p186 = por %p184, %p185
      %p187 = scmp.ne.s32.totalorder %s176, %s177
      %p188 = scmp.eq.s32.totalorder %s32, 0
      %p189 = por %p187, %p188
      %p190 = scmp.ne.s32.totalorder %s176, %s177
      %p191 = scmp.eq.s32.totalorder %s33, 1
      %p192 = por %p190, %p191
      %p194 = scmp.ne.s32.totalorder %s177, %s193
      %p195 = scmp.eq.s32.totalorder %s33, 0
      %p196 = por %p194, %p195
      %s197 = ssub.s32 %s34, %s46
      %s198 = ssub.s32 %s35, %s42
      %s199 = sor.u32 %s197, %s198
      %p200 = scmp.eq.s32.totalorder %s199, 0
      %s202 = sadd.s32 %s201, 1
      %s203 = scalar_select %p200, %s201, %s202
      %p206 = pneg %p200
      %p207 = scmp.eq.s32.totalorder %s27, 1
      %p208 = por %p206, %p207
      %p209 = scmp.ne.s32.totalorder %s201, %s204
      %p210 = scmp.eq.s32.totalorder %s27, 0
      %p211 = por %p209, %p210
      %p212 = scmp.ne.s32.totalorder %s201, %s204
      %p213 = scmp.eq.s32.totalorder %s32, 1
      %p214 = por %p212, %p213
      %p215 = scmp.ne.s32.totalorder %s204, %s205
      %p216 = scmp.eq.s32.totalorder %s32, 0
      %p217 = por %p215, %p216
      %p218 = scmp.ne.s32.totalorder %s204, %s205
      %p219 = scmp.eq.s32.totalorder %s33, 1
      %p220 = por %p218, %p219
      %p222 = scmp.ne.s32.totalorder %s205, %s221
      %p223 = scmp.eq.s32.totalorder %s33, 0
      %p224 = por %p222, %p223
      %s225 = ssub.s32 %s34, %s46
      %s226 = ssub.s32 %s35, %s42
      %s227 = sor.u32 %s225, %s226
      %p228 = scmp.eq.s32.totalorder %s227, 0
      %s230 = sadd.s32 %s229, 1
      %s231 = scalar_select %p228, %s229, %s230
      %p234 = pneg %p228
      %p235 = scmp.eq.s32.totalorder %s27, 1
      %p236 = por %p234, %p235
      %p237 = scmp.ne.s32.totalorder %s229, %s232
      %p238 = scmp.eq.s32.totalorder %s27, 0
      %p239 = por %p237, %p238
      %p240 = scmp.ne.s32.totalorder %s229, %s232
      %p241 = scmp.eq.s32.totalorder %s32, 1
      %p242 = por %p240, %p241
      %p243 = scmp.ne.s32.totalorder %s232, %s233
      %p244 = scmp.eq.s32.totalorder %s32, 0
      %p245 = por %p243, %p244
      %p246 = scmp.ne.s32.totalorder %s232, %s233
      %p247 = scmp.eq.s32.totalorder %s33, 1
      %p248 = por %p246, %p247
      %p250 = scmp.ne.s32.totalorder %s233, %s249
      %p251 = scmp.eq.s32.totalorder %s33, 0
      %p252 = por %p250, %p251
      %p253 = scmp.le.s32.totalorder 1, %s27
      %p254 = scmp.lt.s32.totalorder %s27, 3
      %p255 = pnand %p253, %p254
      %p256 = pneg %p255
      // Predicated region
      $region9: #{tpu_custom_call.1} parent=5 // pred_check
        _
      $region10: #{tpu_custom_call.1} parent=5 // pred_check_branch
        %258 = sbr.rel (%p255) target = $region12
      $region11: #{tpu_custom_call.1} parent=5 // pred_region
        %s259 = ssub.s32 %s27, 1
        // Predicated region
        $region13: #{tpu_custom_call.1} parent=11 // pred_check
          %p260 = pneg %p140
        $region14: #{tpu_custom_call.1} parent=11 // pred_check_branch
          %262 = sbr.rel (%p260) target = $region16
        $region15: #{tpu_custom_call.1} parent=11 // pred_region
          %s264 = ssub.s32 512, 512
          %265 = vsyncadd [#allocation9], %s264
          %s266 = sshll.u32 [#allocation8], 4
          %s267 = int_to_ptr.vmem [resolvable:$true] %s266
          %272 = dma.hbm_to_vmem [thread:$0]  %s3, 512, %s267, [#allocation9], 128, 128, 8
        $region16: #{tpu_custom_call.1} parent=11 // pred_fallthru
          _
        // Predicated region
        $region17: #{tpu_custom_call.1} parent=11 // pred_check
          %p273 = pneg %p161
        $region18: #{tpu_custom_call.1} parent=11 // pred_check_branch
          %275 = sbr.rel (%p273) target = $region20
        $region19: #{tpu_custom_call.1} parent=11 // pred_region
          %s277 = ssub.s32 16, 16
          %278 = vsyncadd [#allocation9], %s277
          %s280 = sshll.u32 [#allocation10], 4
          %s281 = int_to_ptr.vmem [resolvable:$true] %s280
          %283 = dma.hbm_to_vmem [thread:$0]  %s4, 16, %s281, [#allocation9]
        $region20: #{tpu_custom_call.1} parent=11 // pred_fallthru
          _
      $region12: #{tpu_custom_call.1} parent=5 // pred_fallthru
        _
      %p284 = scmp.lt.s32.totalorder %s27, 2
      // Predicated region
      $region21: #{tpu_custom_call.1} parent=5 // pred_check
        %p285 = pneg %p284
      $region22: #{tpu_custom_call.1} parent=5 // pred_check_branch
        %287 = sbr.rel (%p285) target = $region24
      $region23: #{tpu_custom_call.1} parent=5 // pred_region
        // Predicated region
        $region25: #{tpu_custom_call.1} parent=23 // pred_check
          %p288 = pneg %p61
        $region26: #{tpu_custom_call.1} parent=23 // pred_check_branch
          %290 = sbr.rel (%p288) target = $region28
        $region27: #{tpu_custom_call.1} parent=23 // pred_region
          %s291 = sand.u32 %s51, 1
          %s292 = scalar_lea.sflag [#allocation3], %s291
          %s293 = sand.u32 %s51, 1
          %s294 = smul.addr %s293, 8
          %s295 = scalar_lea.vmem [#allocation2], %s294
          %s297 = ssub.s32 128, 128
          %298 = vsyncadd %s292, %s297
          %s299 = sadd.s32 %s35, %s34
          %s300 = smul.addr %s299, 128
          %s301 = scalar_lea.hbm %s0, %s300
          %s303 = sshll.u32 %s295, 4
          %s304 = int_to_ptr.vmem [resolvable:$true] %s303
          %306 = dma.hbm_to_vmem [thread:$0]  %s301, 128, %s304, %s292
        $region28: #{tpu_custom_call.1} parent=23 // pred_fallthru
          _
        // Predicated region
        $region29: #{tpu_custom_call.1} parent=23 // pred_check
          %p307 = pneg %p87
        $region30: #{tpu_custom_call.1} parent=23 // pred_check_branch
          %309 = sbr.rel (%p307) target = $region32
        $region31: #{tpu_custom_call.1} parent=23 // pred_region
          %s310 = sand.u32 %s27, 1
          %s311 = scalar_lea.sflag [#allocation6], %s310
          %s312 = sand.u32 %s77, 1
          %s313 = scalar_lea.vmem [#allocation5], %s312
          %s315 = ssub.s32 16, 16
          %316 = vsyncadd %s311, %s315
          %s317 = smul.addr %s34, 16
          %s318 = scalar_lea.hbm %s1, %s317
          %s320 = sshll.u32 %s313, 4
          %s321 = int_to_ptr.vmem [resolvable:$true] %s320
          %323 = dma.hbm_to_vmem [thread:$0]  %s318, 16, %s321, %s311
        $region32: #{tpu_custom_call.1} parent=23 // pred_fallthru
          _
        // Predicated region
        $region33: #{tpu_custom_call.1} parent=23 // pred_check
          %p324 = pneg %p113
        $region34: #{tpu_custom_call.1} parent=23 // pred_check_branch
          %326 = sbr.rel (%p324) target = $region36
        $region35: #{tpu_custom_call.1} parent=23 // pred_region
          %s327 = sand.u32 %s27, 1
          %s328 = scalar_lea.sflag [#allocation6], %s327
          %s329 = sand.u32 %s103, 1
          %s330 = scalar_lea.vmem [#allocation7], %s329
          %s332 = ssub.s32 16, 16
          %333 = vsyncadd %s328, %s332
          %s334 = smul.addr %s34, 16
          %s335 = scalar_lea.hbm %s2, %s334
          %s337 = sshll.u32 %s330, 4
          %s338 = int_to_ptr.vmem [resolvable:$true] %s337
          %340 = dma.hbm_to_vmem [thread:$0]  %s335, 16, %s338, %s328
        $region36: #{tpu_custom_call.1} parent=23 // pred_fallthru
          _
      $region24: #{tpu_custom_call.1} parent=5 // pred_fallthru
        _
      %p341 = scmp.le.s32.totalorder 1, %s27
      %p342 = scmp.lt.s32.totalorder %s27, 3
      %p343 = pnand %p341, %p342
      %p344 = pneg %p343
      // Predicated region
      $region37: #{tpu_custom_call.1} parent=5 // pred_check
        _
      $region38: #{tpu_custom_call.1} parent=5 // pred_check_branch
        %346 = sbr.rel (%p343) target = $region40
      $region39: #{tpu_custom_call.1} parent=5 // pred_region
        %s347 = ssub.s32 %s27, 1
        %s348 = sand.u32 %s54, 1
        %s349 = scalar_lea.sflag [#allocation3], %s348
        %s350 = sand.u32 %s54, 1
        %s351 = smul.addr %s350, 8
        %s352 = scalar_lea.vmem [#allocation2], %s351
        // Predicated region
        $region41: #{tpu_custom_call.1} parent=39 // pred_check
          %p353 = pneg %p67
        $region42: #{tpu_custom_call.1} parent=39 // pred_check_branch
          %355 = sbr.rel (%p353) target = $region44
        $region43: #{tpu_custom_call.1} parent=39 // pred_region
          %356 = dma.done %s349, 128
        $region44: #{tpu_custom_call.1} parent=39 // pred_fallthru
          _
        %s357 = sand.u32 %s32, 1
        %s358 = scalar_lea.sflag [#allocation6], %s357
        %s359 = sand.u32 %s80, 1
        %s360 = scalar_lea.vmem [#allocation5], %s359
        // Predicated region
        $region45: #{tpu_custom_call.1} parent=39 // pred_check
          %p361 = pneg %p93
        $region46: #{tpu_custom_call.1} parent=39 // pred_check_branch
          %363 = sbr.rel (%p361) target = $region48
        $region47: #{tpu_custom_call.1} parent=39 // pred_region
          %364 = dma.done %s358, 16
        $region48: #{tpu_custom_call.1} parent=39 // pred_fallthru
          _
        %s365 = sand.u32 %s32, 1
        %s366 = scalar_lea.sflag [#allocation6], %s365
        %s367 = sand.u32 %s106, 1
        %s368 = scalar_lea.vmem [#allocation7], %s367
        // Predicated region
        $region49: #{tpu_custom_call.1} parent=39 // pred_check
          %p369 = pneg %p119
        $region50: #{tpu_custom_call.1} parent=39 // pred_check_branch
          %371 = sbr.rel (%p369) target = $region52
        $region51: #{tpu_custom_call.1} parent=39 // pred_region
          %372 = dma.done %s366, 16
        $region52: #{tpu_custom_call.1} parent=39 // pred_fallthru
          _
        // Predicated region
        $region53: #{tpu_custom_call.1} parent=39 // pred_check
          %p373 = pneg %p140
        $region54: #{tpu_custom_call.1} parent=39 // pred_check_branch
          %375 = sbr.rel (%p373) target = $region56
        $region55: #{tpu_custom_call.1} parent=39 // pred_region
          %376 = dma.done [#allocation9], 512
        $region56: #{tpu_custom_call.1} parent=39 // pred_fallthru
          _
        // Predicated region
        $region57: #{tpu_custom_call.1} parent=39 // pred_check
          %p377 = pneg %p161
        $region58: #{tpu_custom_call.1} parent=39 // pred_check_branch
          %379 = sbr.rel (%p377) target = $region60
        $region59: #{tpu_custom_call.1} parent=39 // pred_region
          %380 = dma.done [#allocation9], 16
        $region60: #{tpu_custom_call.1} parent=39 // pred_fallthru
          _
        %s381 = sand.u32 %s54, 1
        %s382 = scalar_lea.sflag [#allocation3], %s381
        %s383 = sand.u32 %s54, 1
        %s384 = smul.addr %s383, 8
        %s385 = scalar_lea.vmem [#allocation2], %s384
        %p386 = pneg %p67
        %p387 = pneg %p64
        %s388 = sand.u32 %s32, 1
        %s389 = scalar_lea.sflag [#allocation6], %s388
        %s390 = sand.u32 %s80, 1
        %s391 = scalar_lea.vmem [#allocation5], %s390
        %p392 = pneg %p93
        %p393 = pneg %p90
        %s394 = sand.u32 %s32, 1
        %s395 = scalar_lea.sflag [#allocation6], %s394
        %s396 = sand.u32 %s106, 1
        %s397 = scalar_lea.vmem [#allocation7], %s396
        %p398 = pneg %p119
        %p399 = pneg %p116
        %p400 = pneg %p140
        %p401 = pneg %p137
        %p402 = pneg %p161
        %p403 = pneg %p158
        %p404 = pneg %p189
        %p405 = pneg %p186
        %s406 = sand.u32 %s176, 1
        %s407 = scalar_lea.sflag [#allocation4], %s406
        %s408 = sand.u32 %s176, 1
        %s409 = smul.addr %s408, 32
        %s410 = scalar_lea.vmem [#allocation11], %s409
        %p411 = pneg %p217
        %p412 = pneg %p214
        %s413 = sand.u32 %s32, 1
        %s414 = scalar_lea.sflag [#allocation13], %s413
        %s415 = sand.u32 %s204, 1
        %s416 = smul.addr %s415, 32
        %s417 = scalar_lea.vmem [#allocation12], %s416
        %p418 = pneg %p245
        %p419 = pneg %p242
        %s420 = sand.u32 %s32, 1
        %s421 = scalar_lea.sflag [#allocation13], %s420
        %s422 = sand.u32 %s232, 1
        %s423 = smul.addr %s422, 32
        %s424 = scalar_lea.vmem [#allocation14], %s423
        %v425 = vld [vmem:[%s352] sm:$0xff]
        %vm426 = vcmask 261120
        %v427 = vsel %vm426, %v425, 0.0
        %428 = vadd.xlane.f32.xlu0 %v427
        %v429 = vpop.xlane.xlu0 %428
        %v430 = vrcp.pop 32.0
        %v431 = vmul.f32 %v429, %v430
        %v432 = vsub.f32 %v425, %v431
        %v433 = vmul.f32 %v432, %v432
        %v434 = vsel %vm426, %v433, 0.0
        %435 = vadd.xlane.f32.xlu0 %v434
        %v436 = vpop.xlane.xlu0 %435
        %v437 = vmul.f32 %v436, %v430
        %v438 = vadd.f32 %v437, 1e-06
        %v439 = vrsqrt.pop %v438
        %v440 = vmul.f32 %v432, %v439
        %v441 = vld [vmem:[%s368] sm:$0x1]
        %v442 = vadd.f32 %v441, 1.0
        %v444 = vlaneseq
        %v445 = vshrl.u32 %v444, 7
        %v446 = vsub.s32 0, %v445
        %v447 = vrot.slane %v442, %v446
        %v449 = vmul.f32 %v440, %v447
        %v450 = vld [vmem:[%s360] sm:$0x1]
        %v452 = vlaneseq
        %v453 = vshrl.u32 %v452, 7
        %v454 = vsub.s32 0, %v453
        %v455 = vrot.slane %v450, %v454
        %v457 = vadd.f32 %v449, %v455
        %v458 = vld [vmem:[#allocation8] sm:$0xff]
        %v459 = vld [vmem:[#allocation8 + $0x8] sm:$0xff]
        %v460 = vld [vmem:[#allocation8 + $0x10] sm:$0xff]
        %v461 = vld [vmem:[#allocation8 + $0x18] sm:$0xff]
        %v462 = vld [vmem:[#allocation10] sm:$0x1]
        %v464 = vlaneseq
        %v465 = vshrl.u32 %v464, 7
        %v466 = vsub.s32 0, %v465
        %v467 = vrot.slane %v462, %v466
        %v470 = vsel %vm426, %v457, 0
        %472 = vmatprep.subr.mxu0 0.0
        %473 = vmatpush1.msra.mxu0 %v458
        %474 = vmatprep.subr.mxu0 0.0
        %475 = vmatpush1.msra.mxu0 %v459
        %476 = vmatprep.subr.mxu0 0.0
        %477 = vmatpush1.msra.mxu0 %v460
        %478 = vmatprep.subr.mxu0 0.0
        %479 = vmatpush1.msra.mxu0 %v461
        %480 = vmatprep.subr.mxu0 0.0
        %481 = vmatpush1.msra.mxu0 0.0
        %482 = vmatprep.subr.mxu0 0.0
        %483 = vmatpush1.msra.mxu0 0.0
        %484 = vmatprep.subr.mxu0 0.0
        %485 = vmatpush1.msra.mxu0 0.0
        %486 = vmatprep.subr.mxu0 0.0
        %487 = vmatpush1.msra.mxu0 0.0
        %488 = vmatprep.subr.mxu0 0.0
        %489 = vmatpush1.msra.mxu0 0.0
        %490 = vmatprep.subr.mxu0 0.0
        %491 = vmatpush1.msra.mxu0 0.0
        %492 = vmatprep.subr.mxu0 0.0
        %493 = vmatpush1.msra.mxu0 0.0
        %494 = vmatprep.subr.mxu0 0.0
        %495 = vmatpush1.msra.mxu0 0.0
        %496 = vmatprep.subr.mxu0 0.0
        %497 = vmatpush1.msra.mxu0 0.0
        %498 = vmatprep.subr.mxu0 0.0
        %499 = vmatpush1.msra.mxu0 0.0
        %500 = vmatprep.subr.mxu0 0.0
        %501 = vmatpush1.msra.mxu0 0.0
        %502 = vmatprep.subr.mxu0 0.0
        %503 = vmatpush1.msra.mxu0 0.0
        %504 = vmatprep.subr.mxu0 0.0
        %505 = vmatpush1.msra.mxu0 0.0
        %506 = vmatprep.subr.mxu0 0.0
        %507 = vmatpush1.msra.mxu0 0.0
        %508 = vmatprep.subr.mxu0 0.0
        %509 = vmatpush1.msra.mxu0 0.0
        %510 = vmatprep.subr.mxu0 0.0
        %511 = vmatpush1.msra.mxu0 0.0
        %512 = vmatprep.subr.mxu0 0.0
        %513 = vmatpush1.msra.mxu0 0.0
        %514 = vmatprep.subr.mxu0 0.0
        %515 = vmatpush1.msra.mxu0 0.0
        %516 = vmatprep.subr.mxu0 0.0
        %517 = vmatpush1.msra.mxu0 0.0
        %518 = vmatprep.subr.mxu0 0.0
        %519 = vmatpush1.msra.mxu0 0.0
        %520 = vmatprep.subr.mxu0 0.0
        %521 = vmatpush1.msra.mxu0 0.0
        %522 = vmatprep.subr.mxu0 0.0
        %523 = vmatpush1.msra.mxu0 0.0
        %524 = vmatprep.subr.mxu0 0.0
        %525 = vmatpush1.msra.mxu0 0.0
        %526 = vmatprep.subr.mxu0 0.0
        %527 = vmatpush1.msra.mxu0 0.0
        %528 = vmatprep.subr.mxu0 0.0
        %529 = vmatpush1.msra.mxu0 0.0
        %530 = vmatprep.subr.mxu0 0.0
        %531 = vmatpush1.msra.mxu0 0.0
        %532 = vmatprep.subr.mxu0 0.0
        %533 = vmatpush1.msra.mxu0 0.0
        %534 = vmatprep.subr.mxu0 0.0
        %535 = vmatpush1.msra.mxu0 0.0
        %536 = vmatprep.mubr.f32.mxu0 0.0
        %537 = vmatmul.mubr.f32.gmra.mrb[0].mxu0 %v470
        %v538 = vpop.f32.mrb[0].mxu0
        %v539 = vadd.f32 %v467, %v538
        %v540 = vpop.f32.mrb[0].mxu0
        %541 = vdwg.mxu0
        %vm542 = vcmask 64512
        %543 = vst.msk [vmem:[%s410] sm:$0xff] %vm542, %v539
        %545 = vrot.lane.b32.xlu0 %v539, 96
        %v546 = vpop.permute.xlu0 %545
        %548 = vst.msk [vmem:[%s417] sm:$0xff] %vm542, %v546
        %549 = vrot.lane.b32.xlu0 %v539, 64
        %v550 = vpop.permute.xlu0 %549
        %552 = vst.msk [vmem:[%s424] sm:$0xff] %vm542, %v550
        %553 = vrot.lane.b32.xlu0 %v539, 120
        %v554 = vpop.permute.xlu0 %553
        %s556 = scalar_lea.vmem %s410, 8 [#allocation11]
        %557 = vst.msk [vmem:[%s556] sm:$0xff] %vm542, %v554
        %558 = vrot.lane.b32.xlu0 %v539, 88
        %v559 = vpop.permute.xlu0 %558
        %s561 = scalar_lea.vmem %s417, 8 [#allocation12]
        %562 = vst.msk [vmem:[%s561] sm:$0xff] %vm542, %v559
        %563 = vrot.lane.b32.xlu0 %v539, 56
        %v564 = vpop.permute.xlu0 %563
        %s566 = scalar_lea.vmem %s424, 8 [#allocation14]
        %567 = vst.msk [vmem:[%s566] sm:$0xff] %vm542, %v564
        %568 = vrot.lane.b32.xlu0 %v539, 112
        %v569 = vpop.permute.xlu0 %568
        %s571 = scalar_lea.vmem %s410, 16 [#allocation11]
        %572 = vst.msk [vmem:[%s571] sm:$0xff] %vm542, %v569
        %573 = vrot.lane.b32.xlu0 %v539, 80
        %v574 = vpop.permute.xlu0 %573
        %s576 = scalar_lea.vmem %s417, 16 [#allocation12]
        %577 = vst.msk [vmem:[%s576] sm:$0xff] %vm542, %v574
        %578 = vrot.lane.b32.xlu0 %v539, 48
        %v579 = vpop.permute.xlu0 %578
        %s581 = scalar_lea.vmem %s424, 16 [#allocation14]
        %582 = vst.msk [vmem:[%s581] sm:$0xff] %vm542, %v579
        %583 = vrot.lane.b32.xlu0 %v539, 104
        %v584 = vpop.permute.xlu0 %583
        %s586 = scalar_lea.vmem %s410, 24 [#allocation11]
        %587 = vst.msk [vmem:[%s586] sm:$0xff] %vm542, %v584
        %588 = vrot.lane.b32.xlu0 %v539, 72
        %v589 = vpop.permute.xlu0 %588
        %s591 = scalar_lea.vmem %s417, 24 [#allocation12]
        %592 = vst.msk [vmem:[%s591] sm:$0xff] %vm542, %v589
        %593 = vrot.lane.b32.xlu0 %v539, 40
        %v594 = vpop.permute.xlu0 %593
        %s596 = scalar_lea.vmem %s424, 24 [#allocation14]
        %597 = vst.msk [vmem:[%s596] sm:$0xff] %vm542, %v594
        %s598 = sand.u32 %s176, 1
        %s599 = scalar_lea.sflag [#allocation4], %s598
        %s600 = sand.u32 %s176, 1
        %s601 = smul.addr %s600, 32
        %s602 = scalar_lea.vmem [#allocation11], %s601
        %s603 = sand.u32 %s32, 1
        %s604 = scalar_lea.sflag [#allocation13], %s603
        %s605 = sand.u32 %s204, 1
        %s606 = smul.addr %s605, 32
        %s607 = scalar_lea.vmem [#allocation12], %s606
        %s608 = sand.u32 %s32, 1
        %s609 = scalar_lea.sflag [#allocation13], %s608
        %s610 = sand.u32 %s232, 1
        %s611 = smul.addr %s610, 32
        %s612 = scalar_lea.vmem [#allocation14], %s611
        // Predicated region
        $region61: #{tpu_custom_call.1} parent=39 // pred_check
          %p613 = pneg %p186
        $region62: #{tpu_custom_call.1} parent=39 // pred_check_branch
          %615 = sbr.rel (%p613) target = $region64
        $region63: #{tpu_custom_call.1} parent=39 // pred_region
          %s617 = ssub.s32 512, 512
          %618 = vsyncadd %s599, %s617
          %s619 = smul.addr %s36, 4
          %s620 = sadd.s32 %s37, %s619
          %s621 = smul.addr %s620, 128
          %s622 = scalar_lea.hbm %s5, %s621
          %s623 = sshll.u32 %s602, 4
          %s624 = int_to_ptr.vmem [resolvable:$true] %s623
          %629 = dma.vmem_to_hbm [thread:$0]  %s624, 512, %s622, %s599, 128, 128, 8
        $region64: #{tpu_custom_call.1} parent=39 // pred_fallthru
          _
        // Predicated region
        $region65: #{tpu_custom_call.1} parent=39 // pred_check
          %p630 = pneg %p214
        $region66: #{tpu_custom_call.1} parent=39 // pred_check_branch
          %632 = sbr.rel (%p630) target = $region68
        $region67: #{tpu_custom_call.1} parent=39 // pred_region
          %s634 = ssub.s32 512, 512
          %635 = vsyncadd %s604, %s634
          %s636 = smul.addr %s36, 4
          %s637 = sadd.s32 %s37, %s636
          %s638 = smul.addr %s637, 128
          %s639 = scalar_lea.hbm %s6, %s638
          %s640 = sshll.u32 %s607, 4
          %s641 = int_to_ptr.vmem [resolvable:$true] %s640
          %646 = dma.vmem_to_hbm [thread:$0]  %s641, 512, %s639, %s604, 128, 128, 8
        $region68: #{tpu_custom_call.1} parent=39 // pred_fallthru
          _
        // Predicated region
        $region69: #{tpu_custom_call.1} parent=39 // pred_check
          %p647 = pneg %p242
        $region70: #{tpu_custom_call.1} parent=39 // pred_check_branch
          %649 = sbr.rel (%p647) target = $region72
        $region71: #{tpu_custom_call.1} parent=39 // pred_region
          %s651 = ssub.s32 512, 512
          %652 = vsyncadd %s609, %s651
          %s653 = smul.addr %s36, 4
          %s654 = sadd.s32 %s37, %s653
          %s655 = smul.addr %s654, 128
          %s656 = scalar_lea.hbm %s7, %s655
          %s657 = sshll.u32 %s612, 4
          %s658 = int_to_ptr.vmem [resolvable:$true] %s657
          %663 = dma.vmem_to_hbm [thread:$0]  %s658, 512, %s656, %s609, 128, 128, 8
        $region72: #{tpu_custom_call.1} parent=39 // pred_fallthru
          _
      $region40: #{tpu_custom_call.1} parent=5 // pred_fallthru
        _
      %p664 = scmp.le.s32.totalorder 2, %s27
      // Predicated region
      $region73: #{tpu_custom_call.1} parent=5 // pred_check
        %p665 = pneg %p664
      $region74: #{tpu_custom_call.1} parent=5 // pred_check_branch
        %667 = sbr.rel (%p665) target = $region76
      $region75: #{tpu_custom_call.1} parent=5 // pred_region
        %s668 = ssub.s32 %s27, 2
        // Predicated region
        $region77: #{tpu_custom_call.1} parent=75 // pred_check
          %p669 = pneg %p192
        $region78: #{tpu_custom_call.1} parent=75 // pred_check_branch
          %671 = sbr.rel (%p669) target = $region80
        $region79: #{tpu_custom_call.1} parent=75 // pred_region
          %s672 = sand.u32 %s177, 1
          %s673 = scalar_lea.sflag [#allocation4], %s672
          %s674 = sand.u32 %s177, 1
          %s675 = smul.addr %s674, 32
          %s676 = scalar_lea.vmem [#allocation11], %s675
          %677 = dma.done %s673, 512
        $region80: #{tpu_custom_call.1} parent=75 // pred_fallthru
          _
        // Predicated region
        $region81: #{tpu_custom_call.1} parent=75 // pred_check
          %p678 = pneg %p220
        $region82: #{tpu_custom_call.1} parent=75 // pred_check_branch
          %680 = sbr.rel (%p678) target = $region84
        $region83: #{tpu_custom_call.1} parent=75 // pred_region
          %s681 = sand.u32 %s33, 1
          %s682 = scalar_lea.sflag [#allocation13], %s681
          %s683 = sand.u32 %s205, 1
          %s684 = smul.addr %s683, 32
          %s685 = scalar_lea.vmem [#allocation12], %s684
          %686 = dma.done %s682, 512
        $region84: #{tpu_custom_call.1} parent=75 // pred_fallthru
          _
        // Predicated region
        $region85: #{tpu_custom_call.1} parent=75 // pred_check
          %p687 = pneg %p248
        $region86: #{tpu_custom_call.1} parent=75 // pred_check_branch
          %689 = sbr.rel (%p687) target = $region88
        $region87: #{tpu_custom_call.1} parent=75 // pred_region
          %s690 = sand.u32 %s33, 1
          %s691 = scalar_lea.sflag [#allocation13], %s690
          %s692 = sand.u32 %s233, 1
          %s693 = smul.addr %s692, 32
          %s694 = scalar_lea.vmem [#allocation14], %s693
          %695 = dma.done %s691, 512
        $region88: #{tpu_custom_call.1} parent=75 // pred_fallthru
          _
      $region76: #{tpu_custom_call.1} parent=5 // pred_fallthru
        _
    $region6: #{tpu_custom_call.1} parent=1 // loop_footer
      %s31 = sadd.s32 1, %s27
    $region7: #{tpu_custom_call.1} parent=1 // loop_footer_branch
      %26 = sbr.rel target = $region3
    $region8: #{tpu_custom_call.1} parent=1 // loop_exit
      _
    %696 = vsyncpa [#allocation3], 1
    %s697 = scalar_lea.sflag [#allocation3], 1
    %698 = vsyncpa %s697, 1
    %699 = vsyncpa [#allocation6], 1
    %s700 = scalar_lea.sflag [#allocation6], 1
    %701 = vsyncpa %s700, 1
    %702 = vsyncpa [#allocation9], 1
    %703 = vsyncpa [#allocation4], 1
    %s704 = scalar_lea.sflag [#allocation4], 1
    %705 = vsyncpa %s704, 1
    %706 = vsyncpa [#allocation13], 1
    %s707 = scalar_lea.sflag [#allocation13], 1
    %708 = vsyncpa %s707, 1

// kernel: tpu_custom_call.1
$region0: #{tpu_custom_call.1}
  #allocation0 [shape = 'u32[]', space=smem, size = 0x4, offset = 0x4, fixed_abs, tag = 'smem constant byte address 0x4 - core index']
  #allocation1 [shape = 'u32[144,128]{1,0:T(1,128)}', space=vmem, size = 0x12000, scoped, tag = 'internal scratch']
  %s0 = inlined_call_operand.hbm [shape: f32[2,8,32], index: 0, kind: input, shape index: {}]
  %s1 = inlined_call_operand.hbm [shape: f32[2,1,32], index: 1, kind: input, shape index: {}]
  %s2 = inlined_call_operand.hbm [shape: f32[2,1,32], index: 2, kind: input, shape index: {}]
  %s3 = inlined_call_operand.hbm [shape: f32[32,96], index: 3, kind: input, shape index: {}]
  %s4 = inlined_call_operand.hbm [shape: f32[1,96], index: 4, kind: input, shape index: {}]
  %s5 = inlined_call_operand.hbm [shape: f32[2,4,8,8], index: 5, kind: output, shape index: {0}]
  %s6 = inlined_call_operand.hbm [shape: f32[2,4,8,8], index: 6, kind: output, shape index: {1}]
  %s7 = inlined_call_operand.hbm [shape: f32[2,4,8,8], index: 7, kind: output, shape index: {2}]
  %8 = xla_tuple %s5, %s6, %s7
  %s9 = sld [smem:[#allocation0]]
  $region89: #{tpu_custom_call.1} parent=0
    _
  %s11 = ssub.s32 1, %s9
  %s12 = scalar_select 0, %s11, %s9
  $region1: #{tpu_custom_call.1} parent=0
    #allocation2 [shape = 'u8[8192]{0}', space=vmem, size = 0x2000, scoped, tag = 'input window, operand 0']
    #allocation3 [shape = 's32[2]{0}', space=sflag, size = 0x8, scoped, tag = 'scoped memory for tpu_custom_call.1']
    #allocation4 [shape = 's32[2]{0}', space=sflag, size = 0x8, scoped, tag = 'scoped memory for tpu_custom_call.1']
    #allocation5 [shape = 'u8[1024]{0}', space=vmem, size = 0x400, scoped, tag = 'input window, operand 1']
    #allocation6 [shape = 's32[2]{0}', space=sflag, size = 0x8, scoped, tag = 'scoped memory for tpu_custom_call.1']
    #allocation7 [shape = 'u8[1024]{0}', space=vmem, size = 0x400, scoped, tag = 'input window, operand 2']
    #allocation8 [shape = 'u8[16384]{0}', space=vmem, size = 0x4000, scoped, tag = 'input window, operand 3, single buffered']
    #allocation9 [shape = 's32[1]{0}', space=sflag, size = 0x4, scoped, tag = 'scoped memory for tpu_custom_call.1']
    #allocation10 [shape = 'u8[512]{0}', space=vmem, size = 0x400, scoped, tag = 'input window, operand 4, single buffered']
    #allocation11 [shape = 'u8[32768]{0}', space=vmem, size = 0x8000, scoped, tag = 'output window, operand 0']
    #allocation12 [shape = 'u8[32768]{0}', space=vmem, size = 0x8000, scoped, tag = 'output window, operand 1']
    #allocation13 [shape = 's32[2]{0}', space=sflag, size = 0x8, scoped, tag = 'scoped memory for tpu_custom_call.1']
    #allocation14 [shape = 'u8[32768]{0}', space=vmem, size = 0x8000, scoped, tag = 'output window, operand 2']
    %13 = vsyncpa [#allocation3], 0
    %s14 = scalar_lea.sflag [#allocation3], 1
    %15 = vsyncpa %s14, 0
    %16 = vsyncpa [#allocation6], 0
    %s17 = scalar_lea.sflag [#allocation6], 1
    %18 = vsyncpa %s17, 0
    %19 = vsyncpa [#allocation9], 0
    %20 = vsyncpa [#allocation4], 0
    %s21 = scalar_lea.sflag [#allocation4], 1
    %22 = vsyncpa %s21, 0
    %23 = vsyncpa [#allocation13], 0
    %s24 = scalar_lea.sflag [#allocation13], 1
    %25 = vsyncpa %s24, 0
    loop: start=0, step=1, limit=4
    $region2: #{tpu_custom_call.1} parent=1 // loop_pre_header
      _
    $region3: #{tpu_custom_call.1} parent=1 // loop_header
      %s27 = sphi 0, %s31
      %p28 = scmp.ge.s32.totalorder %s27, 4
      %s34 = sphi 0, %s46
      %s35 = sphi 0, %s42
      %s36 = sphi 0, %s34
      %s37 = sphi 0, %s35
      %s38 = sphi 0, %s36
      %s39 = sphi 0, %s37
      %s51 = sphi 0, %s53
      %s54 = sphi 0, %s51
      %s55 = sphi 0, %s54
      %s71 = sphi 0, %s55
      %s77 = sphi 0, %s79
      %s80 = sphi 0, %s77
      %s81 = sphi 0, %s80
      %s97 = sphi 0, %s81
      %s103 = sphi 0, %s105
      %s106 = sphi 0, %s103
      %s107 = sphi 0, %s106
      %s123 = sphi 0, %s107
      %s127 = sphi 0, %s127
      %s129 = sphi 0, %s127
      %s130 = sphi 0, %s129
      %s144 = sphi 0, %s130
      %s148 = sphi 0, %s148
      %s150 = sphi 0, %s148
      %s151 = sphi 0, %s150
      %s165 = sphi 0, %s151
      %s173 = sphi 0, %s175
      %s176 = sphi 0, %s173
      %s177 = sphi 0, %s176
      %s193 = sphi 0, %s177
      %s201 = sphi 0, %s203
      %s204 = sphi 0, %s201
      %s205 = sphi 0, %s204
      %s221 = sphi 0, %s205
      %s229 = sphi 0, %s231
      %s232 = sphi 0, %s229
      %s233 = sphi 0, %s232
      %s249 = sphi 0, %s233
    $region4: #{tpu_custom_call.1} parent=1 // loop_header_branch
      %30 = sbr.rel (%p28) target = $region8
    $region5: #{tpu_custom_call.1} parent=1 // loop_body
      %s32 = ssub.s32 %s27, 1
      %s33 = ssub.s32 %s27, 2
      %s40 = sadd.s32 1, %s35
      %p41 = scmp.ge.s32.totalorder %s40, 1
      %s42 = scalar_select %p41, 0, %s40
      %s43 = sadd.s32 1, %s34
      %s44 = scalar_select %p41, %s43, %s34
      %p45 = scmp.ge.s32.totalorder %s44, 2
      %s46 = scalar_select %p45, 0, %s44
      %s47 = ssub.s32 %s34, %s46
      %s48 = ssub.s32 %s35, %s42
      %s49 = sor.u32 %s47, %s48
      %p50 = scmp.eq.s32.totalorder %s49, 0
      %s52 = sadd.s32 %s51, 1
      %s53 = scalar_select %p50, %s51, %s52
      %p56 = pneg %p50
      %p57 = scmp.eq.s32.totalorder %s27, 1
      %p58 = por %p56, %p57
      %p59 = scmp.ne.s32.totalorder %s51, %s54
      %p60 = scmp.eq.s32.totalorder %s27, 0
      %p61 = por %p59, %p60
      %p62 = scmp.ne.s32.totalorder %s51, %s54
      %p63 = scmp.eq.s32.totalorder %s32, 1
      %p64 = por %p62, %p63
      %p65 = scmp.ne.s32.totalorder %s54, %s55
      %p66 = scmp.eq.s32.totalorder %s32, 0
      %p67 = por %p65, %p66
      %p68 = scmp.ne.s32.totalorder %s54, %s55
      %p69 = scmp.eq.s32.totalorder %s33, 1
      %p70 = por %p68, %p69
      %p72 = scmp.ne.s32.totalorder %s55, %s71
      %p73 = scmp.eq.s32.totalorder %s33, 0
      %p74 = por %p72, %p73
      %s75 = ssub.s32 %s34, %s46
      %p76 = scmp.eq.s32.totalorder %s75, 0
      %s78 = sadd.s32 %s77, 1
      %s79 = scalar_select %p76, %s77, %s78
      %p82 = pneg %p76
      %p83 = scmp.eq.s32.totalorder %s27, 1
      %p84 = por %p82, %p83
      %p85 = scmp.ne.s32.totalorder %s77, %s80
      %p86 = scmp.eq.s32.totalorder %s27, 0
      %p87 = por %p85, %p86
      %p88 = scmp.ne.s32.totalorder %s77, %s80
      %p89 = scmp.eq.s32.totalorder %s32, 1
      %p90 = por %p88, %p89
      %p91 = scmp.ne.s32.totalorder %s80, %s81
      %p92 = scmp.eq.s32.totalorder %s32, 0
      %p93 = por %p91, %p92
      %p94 = scmp.ne.s32.totalorder %s80, %s81
      %p95 = scmp.eq.s32.totalorder %s33, 1
      %p96 = por %p94, %p95
      %p98 = scmp.ne.s32.totalorder %s81, %s97
      %p99 = scmp.eq.s32.totalorder %s33, 0
      %p100 = por %p98, %p99
      %s101 = ssub.s32 %s34, %s46
      %p102 = scmp.eq.s32.totalorder %s101, 0
      %s104 = sadd.s32 %s103, 1
      %s105 = scalar_select %p102, %s103, %s104
      %p108 = pneg %p102
      %p109 = scmp.eq.s32.totalorder %s27, 1
      %p110 = por %p108, %p109
      %p111 = scmp.ne.s32.totalorder %s103, %s106
      %p112 = scmp.eq.s32.totalorder %s27, 0
      %p113 = por %p111, %p112
      %p114 = scmp.ne.s32.totalorder %s103, %s106
      %p115 = scmp.eq.s32.totalorder %s32, 1
      %p116 = por %p114, %p115
      %p117 = scmp.ne.s32.totalorder %s106, %s107
      %p118 = scmp.eq.s32.totalorder %s32, 0
      %p119 = por %p117, %p118
      %p120 = scmp.ne.s32.totalorder %s106, %s107
      %p121 = scmp.eq.s32.totalorder %s33, 1
      %p122 = por %p120, %p121
      %p124 = scmp.ne.s32.totalorder %s107, %s123
      %p125 = scmp.eq.s32.totalorder %s33, 0
      %p126 = por %p124, %p125
      %s128 = sadd.s32 %s127, 1
      %p131 = scmp.eq.s32.totalorder %s27, 1
      %p132 = scmp.ne.s32.totalorder %s127, %s129
      %p133 = scmp.eq.s32.totalorder %s27, 0
      %p134 = por %p132, %p133
      %p135 = scmp.ne.s32.totalorder %s127, %s129
      %p136 = scmp.eq.s32.totalorder %s32, 1
      %p137 = por %p135, %p136
      %p138 = scmp.ne.s32.totalorder %s129, %s130
      %p139 = scmp.eq.s32.totalorder %s32, 0
      %p140 = por %p138, %p139
      %p141 = scmp.ne.s32.totalorder %s129, %s130
      %p142 = scmp.eq.s32.totalorder %s33, 1
      %p143 = por %p141, %p142
      %p145 = scmp.ne.s32.totalorder %s130, %s144
      %p146 = scmp.eq.s32.totalorder %s33, 0
      %p147 = por %p145, %p146
      %s149 = sadd.s32 %s148, 1
      %p152 = scmp.eq.s32.totalorder %s27, 1
      %p153 = scmp.ne.s32.totalorder %s148, %s150
      %p154 = scmp.eq.s32.totalorder %s27, 0
      %p155 = por %p153, %p154
      %p156 = scmp.ne.s32.totalorder %s148, %s150
      %p157 = scmp.eq.s32.totalorder %s32, 1
      %p158 = por %p156, %p157
      %p159 = scmp.ne.s32.totalorder %s150, %s151
      %p160 = scmp.eq.s32.totalorder %s32, 0
      %p161 = por %p159, %p160
      %p162 = scmp.ne.s32.totalorder %s150, %s151
      %p163 = scmp.eq.s32.totalorder %s33, 1
      %p164 = por %p162, %p163
      %p166 = scmp.ne.s32.totalorder %s151, %s165
      %p167 = scmp.eq.s32.totalorder %s33, 0
      %p168 = por %p166, %p167
      %s169 = ssub.s32 %s34, %s46
      %s170 = ssub.s32 %s35, %s42
      %s171 = sor.u32 %s169, %s170
      %p172 = scmp.eq.s32.totalorder %s171, 0
      %s174 = sadd.s32 %s173, 1
      %s175 = scalar_select %p172, %s173, %s174
      %p178 = pneg %p172
      %p179 = scmp.eq.s32.totalorder %s27, 1
      %p180 = por %p178, %p179
      %p181 = scmp.ne.s32.totalorder %s173, %s176
      %p182 = scmp.eq.s32.totalorder %s27, 0
      %p183 = por %p181, %p182
      %p184 = scmp.ne.s32.totalorder %s173, %s176
      %p185 = scmp.eq.s32.totalorder %s32, 1
      %p186 = por %p184, %p185
      %p187 = scmp.ne.s32.totalorder %s176, %s177
      %p188 = scmp.eq.s32.totalorder %s32, 0
      %p189 = por %p187, %p188
      %p190 = scmp.ne.s32.totalorder %s176, %s177
      %p191 = scmp.eq.s32.totalorder %s33, 1
      %p192 = por %p190, %p191
      %p194 = scmp.ne.s32.totalorder %s177, %s193
      %p195 = scmp.eq.s32.totalorder %s33, 0
      %p196 = por %p194, %p195
      %s197 = ssub.s32 %s34, %s46
      %s198 = ssub.s32 %s35, %s42
      %s199 = sor.u32 %s197, %s198
      %p200 = scmp.eq.s32.totalorder %s199, 0
      %s202 = sadd.s32 %s201, 1
      %s203 = scalar_select %p200, %s201, %s202
      %p206 = pneg %p200
      %p207 = scmp.eq.s32.totalorder %s27, 1
      %p208 = por %p206, %p207
      %p209 = scmp.ne.s32.totalorder %s201, %s204
      %p210 = scmp.eq.s32.totalorder %s27, 0
      %p211 = por %p209, %p210
      %p212 = scmp.ne.s32.totalorder %s201, %s204
      %p213 = scmp.eq.s32.totalorder %s32, 1
      %p214 = por %p212, %p213
      %p215 = scmp.ne.s32.totalorder %s204, %s205
      %p216 = scmp.eq.s32.totalorder %s32, 0
      %p217 = por %p215, %p216
      %p218 = scmp.ne.s32.totalorder %s204, %s205
      %p219 = scmp.eq.s32.totalorder %s33, 1
      %p220 = por %p218, %p219
      %p222 = scmp.ne.s32.totalorder %s205, %s221
      %p223 = scmp.eq.s32.totalorder %s33, 0
      %p224 = por %p222, %p223
      %s225 = ssub.s32 %s34, %s46
      %s226 = ssub.s32 %s35, %s42
      %s227 = sor.u32 %s225, %s226
      %p228 = scmp.eq.s32.totalorder %s227, 0
      %s230 = sadd.s32 %s229, 1
      %s231 = scalar_select %p228, %s229, %s230
      %p234 = pneg %p228
      %p235 = scmp.eq.s32.totalorder %s27, 1
      %p236 = por %p234, %p235
      %p237 = scmp.ne.s32.totalorder %s229, %s232
      %p238 = scmp.eq.s32.totalorder %s27, 0
      %p239 = por %p237, %p238
      %p240 = scmp.ne.s32.totalorder %s229, %s232
      %p241 = scmp.eq.s32.totalorder %s32, 1
      %p242 = por %p240, %p241
      %p243 = scmp.ne.s32.totalorder %s232, %s233
      %p244 = scmp.eq.s32.totalorder %s32, 0
      %p245 = por %p243, %p244
      %p246 = scmp.ne.s32.totalorder %s232, %s233
      %p247 = scmp.eq.s32.totalorder %s33, 1
      %p248 = por %p246, %p247
      %p250 = scmp.ne.s32.totalorder %s233, %s249
      %p251 = scmp.eq.s32.totalorder %s33, 0
      %p252 = por %p250, %p251
      %p253 = scmp.le.s32.totalorder 1, %s27
      %p254 = scmp.lt.s32.totalorder %s27, 3
      %p255 = pnand %p253, %p254
      %p256 = pneg %p255
      // Predicated region
      $region9: #{tpu_custom_call.1} parent=5 // pred_check
        _
      $region10: #{tpu_custom_call.1} parent=5 // pred_check_branch
        %258 = sbr.rel (%p255) target = $region12
      $region11: #{tpu_custom_call.1} parent=5 // pred_region
        %s259 = ssub.s32 %s27, 1
        // Predicated region
        $region13: #{tpu_custom_call.1} parent=11 // pred_check
          %p260 = pneg %p140
        $region14: #{tpu_custom_call.1} parent=11 // pred_check_branch
          %262 = sbr.rel (%p260) target = $region16
        $region15: #{tpu_custom_call.1} parent=11 // pred_region
          %s264 = ssub.s32 512, 512
          %265 = vsyncadd [#allocation9], %s264
          %s266 = sshll.u32 [#allocation8], 4
          %s267 = int_to_ptr.vmem [resolvable:$true] %s266
          %272 = dma.hbm_to_vmem [thread:$0]  %s3, 512, %s267, [#allocation9], 128, 128, 8
        $region16: #{tpu_custom_call.1} parent=11 // pred_fallthru
          _
        // Predicated region
        $region17: #{tpu_custom_call.1} parent=11 // pred_check
          %p273 = pneg %p161
        $region18: #{tpu_custom_call.1} parent=11 // pred_check_branch
          %275 = sbr.rel (%p273) target = $region20
        $region19: #{tpu_custom_call.1} parent=11 // pred_region
          %s277 = ssub.s32 16, 16
          %278 = vsyncadd [#allocation9], %s277
          %s280 = sshll.u32 [#allocation10], 4
          %s281 = int_to_ptr.vmem [resolvable:$true] %s280
          %283 = dma.hbm_to_vmem [thread:$0]  %s4, 16, %s281, [#allocation9]
        $region20: #{tpu_custom_call.1} parent=11 // pred_fallthru
          _
      $region12: #{tpu_custom_call.1} parent=5 // pred_fallthru
        _
      %p284 = scmp.lt.s32.totalorder %s27, 2
      // Predicated region
      $region21: #{tpu_custom_call.1} parent=5 // pred_check
        %p285 = pneg %p284
      $region22: #{tpu_custom_call.1} parent=5 // pred_check_branch
        %287 = sbr.rel (%p285) target = $region24
      $region23: #{tpu_custom_call.1} parent=5 // pred_region
        // Predicated region
        $region25: #{tpu_custom_call.1} parent=23 // pred_check
          %p288 = pneg %p61
        $region26: #{tpu_custom_call.1} parent=23 // pred_check_branch
          %290 = sbr.rel (%p288) target = $region28
        $region27: #{tpu_custom_call.1} parent=23 // pred_region
          %s291 = sand.u32 %s51, 1
          %s292 = scalar_lea.sflag [#allocation3], %s291
          %s293 = sand.u32 %s51, 1
          %s294 = smul.addr %s293, 8
          %s295 = scalar_lea.vmem [#allocation2], %s294
          %s297 = ssub.s32 128, 128
          %298 = vsyncadd %s292, %s297
          %s299 = sadd.s32 %s35, %s34
          %s300 = smul.addr %s299, 128
          %s301 = scalar_lea.hbm %s0, %s300
          %s303 = sshll.u32 %s295, 4
          %s304 = int_to_ptr.vmem [resolvable:$true] %s303
          %306 = dma.hbm_to_vmem [thread:$0]  %s301, 128, %s304, %s292
        $region28: #{tpu_custom_call.1} parent=23 // pred_fallthru
          _
        // Predicated region
        $region29: #{tpu_custom_call.1} parent=23 // pred_check
          %p307 = pneg %p87
        $region30: #{tpu_custom_call.1} parent=23 // pred_check_branch
          %309 = sbr.rel (%p307) target = $region32
        $region31: #{tpu_custom_call.1} parent=23 // pred_region
          %s310 = sand.u32 %s27, 1
          %s311 = scalar_lea.sflag [#allocation6], %s310
          %s312 = sand.u32 %s77, 1
          %s313 = scalar_lea.vmem [#allocation5], %s312
          %s315 = ssub.s32 16, 16
          %316 = vsyncadd %s311, %s315
          %s317 = smul.addr %s34, 16
          %s318 = scalar_lea.hbm %s1, %s317
          %s320 = sshll.u32 %s313, 4
          %s321 = int_to_ptr.vmem [resolvable:$true] %s320
          %323 = dma.hbm_to_vmem [thread:$0]  %s318, 16, %s321, %s311
        $region32: #{tpu_custom_call.1} parent=23 // pred_fallthru
          _
        // Predicated region
        $region33: #{tpu_custom_call.1} parent=23 // pred_check
          %p324 = pneg %p113
        $region34: #{tpu_custom_call.1} parent=23 // pred_check_branch
          %326 = sbr.rel (%p324) target = $region36
        $region35: #{tpu_custom_call.1} parent=23 // pred_region
          %s327 = sand.u32 %s27, 1
          %s328 = scalar_lea.sflag [#allocation6], %s327
          %s329 = sand.u32 %s103, 1
          %s330 = scalar_lea.vmem [#allocation7], %s329
          %s332 = ssub.s32 16, 16
          %333 = vsyncadd %s328, %s332
          %s334 = smul.addr %s34, 16
          %s335 = scalar_lea.hbm %s2, %s334
          %s337 = sshll.u32 %s330, 4
          %s338 = int_to_ptr.vmem [resolvable:$true] %s337
          %340 = dma.hbm_to_vmem [thread:$0]  %s335, 16, %s338, %s328
        $region36: #{tpu_custom_call.1} parent=23 // pred_fallthru
          _
      $region24: #{tpu_custom_call.1} parent=5 // pred_fallthru
        _
      %p341 = scmp.le.s32.totalorder 1, %s27
      %p342 = scmp.lt.s32.totalorder %s27, 3
      %p343 = pnand %p341, %p342
      %p344 = pneg %p343
      // Predicated region
      $region37: #{tpu_custom_call.1} parent=5 // pred_check
        _
      $region38: #{tpu_custom_call.1} parent=5 // pred_check_branch
        %346 = sbr.rel (%p343) target = $region40
      $region39: #{tpu_custom_call.1} parent=5 // pred_region
        %s347 = ssub.s32 %s27, 1
        %s348 = sand.u32 %s54, 1
        %s349 = scalar_lea.sflag [#allocation3], %s348
        %s350 = sand.u32 %s54, 1
        %s351 = smul.addr %s350, 8
        %s352 = scalar_lea.vmem [#allocation2], %s351
        // Predicated region
        $region41: #{tpu_custom_call.1} parent=39 // pred_check
          %p353 = pneg %p67
        $region42: #{tpu_custom_call.1} parent=39 // pred_check_branch
          %355 = sbr.rel (%p353) target = $region44
        $region43: #{tpu_custom_call.1} parent=39 // pred_region
          %356 = dma.done %s349, 128
        $region44: #{tpu_custom_call.1} parent=39 // pred_fallthru
          _
        %s357 = sand.u32 %s32, 1
        %s358 = scalar_lea.sflag [#allocation6], %s357
        %s359 = sand.u32 %s80, 1
        %s360 = scalar_lea.vmem [#allocation5], %s359
        // Predicated region
        $region45: #{tpu_custom_call.1} parent=39 // pred_check
          %p361 = pneg %p93
        $region46: #{tpu_custom_call.1} parent=39 // pred_check_branch
          %363 = sbr.rel (%p361) target = $region48
        $region47: #{tpu_custom_call.1} parent=39 // pred_region
          %364 = dma.done %s358, 16
        $region48: #{tpu_custom_call.1} parent=39 // pred_fallthru
          _
        %s365 = sand.u32 %s32, 1
        %s366 = scalar_lea.sflag [#allocation6], %s365
        %s367 = sand.u32 %s106, 1
        %s368 = scalar_lea.vmem [#allocation7], %s367
        // Predicated region
        $region49: #{tpu_custom_call.1} parent=39 // pred_check
          %p369 = pneg %p119
        $region50: #{tpu_custom_call.1} parent=39 // pred_check_branch
          %371 = sbr.rel (%p369) target = $region52
        $region51: #{tpu_custom_call.1} parent=39 // pred_region
          %372 = dma.done %s366, 16
        $region52: #{tpu_custom_call.1} parent=39 // pred_fallthru
          _
        // Predicated region
        $region53: #{tpu_custom_call.1} parent=39 // pred_check
          %p373 = pneg %p140
        $region54: #{tpu_custom_call.1} parent=39 // pred_check_branch
          %375 = sbr.rel (%p373) target = $region56
        $region55: #{tpu_custom_call.1} parent=39 // pred_region
          %376 = dma.done [#allocation9], 512
        $region56: #{tpu_custom_call.1} parent=39 // pred_fallthru
          _
        // Predicated region
        $region57: #{tpu_custom_call.1} parent=39 // pred_check
          %p377 = pneg %p161
        $region58: #{tpu_custom_call.1} parent=39 // pred_check_branch
          %379 = sbr.rel (%p377) target = $region60
        $region59: #{tpu_custom_call.1} parent=39 // pred_region
          %380 = dma.done [#allocation9], 16
        $region60: #{tpu_custom_call.1} parent=39 // pred_fallthru
          _
        %s381 = sand.u32 %s54, 1
        %s382 = scalar_lea.sflag [#allocation3], %s381
        %s383 = sand.u32 %s54, 1
        %s384 = smul.addr %s383, 8
        %s385 = scalar_lea.vmem [#allocation2], %s384
        %p386 = pneg %p67
        %p387 = pneg %p64
        %s388 = sand.u32 %s32, 1
        %s389 = scalar_lea.sflag [#allocation6], %s388
        %s390 = sand.u32 %s80, 1
        %s391 = scalar_lea.vmem [#allocation5], %s390
        %p392 = pneg %p93
        %p393 = pneg %p90
        %s394 = sand.u32 %s32, 1
        %s395 = scalar_lea.sflag [#allocation6], %s394
        %s396 = sand.u32 %s106, 1
        %s397 = scalar_lea.vmem [#allocation7], %s396
        %p398 = pneg %p119
        %p399 = pneg %p116
        %p400 = pneg %p140
        %p401 = pneg %p137
        %p402 = pneg %p161
        %p403 = pneg %p158
        %p404 = pneg %p189
        %p405 = pneg %p186
        %s406 = sand.u32 %s176, 1
        %s407 = scalar_lea.sflag [#allocation4], %s406
        %s408 = sand.u32 %s176, 1
        %s409 = smul.addr %s408, 32
        %s410 = scalar_lea.vmem [#allocation11], %s409
        %p411 = pneg %p217
        %p412 = pneg %p214
        %s413 = sand.u32 %s32, 1
        %s414 = scalar_lea.sflag [#allocation13], %s413
        %s415 = sand.u32 %s204, 1
        %s416 = smul.addr %s415, 32
        %s417 = scalar_lea.vmem [#allocation12], %s416
        %p418 = pneg %p245
        %p419 = pneg %p242
        %s420 = sand.u32 %s32, 1
        %s421 = scalar_lea.sflag [#allocation13], %s420
        %s422 = sand.u32 %s232, 1
        %s423 = smul.addr %s422, 32
        %s424 = scalar_lea.vmem [#allocation14], %s423
        %v425 = vld [vmem:[%s352] sm:$0xff]
        %vm426 = vcmask 261120
        %v427 = vsel %vm426, %v425, 0.0
        %428 = vadd.xlane.f32.xlu0 %v427
        %v429 = vpop.xlane.xlu0 %428
        %v430 = vrcp.pop 32.0
        %v431 = vmul.f32 %v429, %v430
        %v432 = vsub.f32 %v425, %v431
        %v433 = vmul.f32 %v432, %v432
        %v434 = vsel %vm426, %v433, 0.0
        %435 = vadd.xlane.f32.xlu0 %v434
        %v436 = vpop.xlane.xlu0 %435
        %v437 = vmul.f32 %v436, %v430
        %v438 = vadd.f32 %v437, 1e-06
        %v439 = vrsqrt.pop %v438
        %v440 = vmul.f32 %v432, %v439
        %v441 = vld [vmem:[%s368] sm:$0x1]
        %v442 = vadd.f32 %v441, 1.0
        %v444 = vlaneseq
        %v445 = vshrl.u32 %v444, 7
        %v446 = vsub.s32 0, %v445
        %v447 = vrot.slane %v442, %v446
        %v449 = vmul.f32 %v440, %v447
        %v450 = vld [vmem:[%s360] sm:$0x1]
        %v452 = vlaneseq
        %v453 = vshrl.u32 %v452, 7
        %v454 = vsub.s32 0, %v453
        %v455 = vrot.slane %v450, %v454
        %v457 = vadd.f32 %v449, %v455
        %v458 = vld [vmem:[#allocation8] sm:$0xff]
        %v459 = vld [vmem:[#allocation8 + $0x8] sm:$0xff]
        %v460 = vld [vmem:[#allocation8 + $0x10] sm:$0xff]
        %v461 = vld [vmem:[#allocation8 + $0x18] sm:$0xff]
        %v462 = vld [vmem:[#allocation10] sm:$0x1]
        %v464 = vlaneseq
        %v465 = vshrl.u32 %v464, 7
        %v466 = vsub.s32 0, %v465
        %v467 = vrot.slane %v462, %v466
        %v470 = vsel %vm426, %v457, 0
        %472 = vmatprep.subr.mxu0 0.0
        %473 = vmatpush1.msra.mxu0 %v458
        %474 = vmatprep.subr.mxu0 0.0
        %475 = vmatpush1.msra.mxu0 %v459
        %476 = vmatprep.subr.mxu0 0.0
        %477 = vmatpush1.msra.mxu0 %v460
        %478 = vmatprep.subr.mxu0 0.0
        %479 = vmatpush1.msra.mxu0 %v461
        %480 = vmatprep.subr.mxu0 0.0
        %481 = vmatpush1.msra.mxu0 0.0
        %482 = vmatprep.subr.mxu0 0.0
        %483 = vmatpush1.msra.mxu0 0.0
        %484 = vmatprep.subr.mxu0 0.0
        %485 = vmatpush1.msra.mxu0 0.0
        %486 = vmatprep.subr.mxu0 0.0
        %487 = vmatpush1.msra.mxu0 0.0
        %488 = vmatprep.subr.mxu0 0.0
        %489 = vmatpush1.msra.mxu0 0.0
        %490 = vmatprep.subr.mxu0 0.0
        %491 = vmatpush1.msra.mxu0 0.0
        %492 = vmatprep.subr.mxu0 0.0
        %493 = vmatpush1.msra.mxu0 0.0
        %494 = vmatprep.subr.mxu0 0.0
        %495 = vmatpush1.msra.mxu0 0.0
        %496 = vmatprep.subr.mxu0 0.0
        %497 = vmatpush1.msra.mxu0 0.0
        %498 = vmatprep.subr.mxu0 0.0
        %499 = vmatpush1.msra.mxu0 0.0
        %500 = vmatprep.subr.mxu0 0.0
        %501 = vmatpush1.msra.mxu0 0.0
        %502 = vmatprep.subr.mxu0 0.0
        %503 = vmatpush1.msra.mxu0 0.0
        %504 = vmatprep.subr.mxu0 0.0
        %505 = vmatpush1.msra.mxu0 0.0
        %506 = vmatprep.subr.mxu0 0.0
        %507 = vmatpush1.msra.mxu0 0.0
        %508 = vmatprep.subr.mxu0 0.0
        %509 = vmatpush1.msra.mxu0 0.0
        %510 = vmatprep.subr.mxu0 0.0
        %511 = vmatpush1.msra.mxu0 0.0
        %512 = vmatprep.subr.mxu0 0.0
        %513 = vmatpush1.msra.mxu0 0.0
        %514 = vmatprep.subr.mxu0 0.0
        %515 = vmatpush1.msra.mxu0 0.0
        %516 = vmatprep.subr.mxu0 0.0
        %517 = vmatpush1.msra.mxu0 0.0
        %518 = vmatprep.subr.mxu0 0.0
        %519 = vmatpush1.msra.mxu0 0.0
        %520 = vmatprep.subr.mxu0 0.0
        %521 = vmatpush1.msra.mxu0 0.0
        %522 = vmatprep.subr.mxu0 0.0
        %523 = vmatpush1.msra.mxu0 0.0
        %524 = vmatprep.subr.mxu0 0.0
        %525 = vmatpush1.msra.mxu0 0.0
        %526 = vmatprep.subr.mxu0 0.0
        %527 = vmatpush1.msra.mxu0 0.0
        %528 = vmatprep.subr.mxu0 0.0
        %529 = vmatpush1.msra.mxu0 0.0
        %530 = vmatprep.subr.mxu0 0.0
        %531 = vmatpush1.msra.mxu0 0.0
        %532 = vmatprep.subr.mxu0 0.0
        %533 = vmatpush1.msra.mxu0 0.0
        %534 = vmatprep.subr.mxu0 0.0
        %535 = vmatpush1.msra.mxu0 0.0
        %536 = vmatprep.mubr.f32.mxu0 0.0
        %537 = vmatmul.mubr.f32.gmra.mrb[0].mxu0 %v470
        %v538 = vpop.f32.mrb[0].mxu0
        %v539 = vadd.f32 %v467, %v538
        %v540 = vpop.f32.mrb[0].mxu0
        %541 = vdwg.mxu0
        %vm542 = vcmask 64512
        %543 = vst.msk [vmem:[%s410] sm:$0xff] %vm542, %v539
        %545 = vrot.lane.b32.xlu0 %v539, 96
        %v546 = vpop.permute.xlu0 %545
        %548 = vst.msk [vmem:[%s417] sm:$0xff] %vm542, %v546
        %549 = vrot.lane.b32.xlu0 %v539, 64
        %v550 = vpop.permute.xlu0 %549
        %552 = vst.msk [vmem:[%s424] sm:$0xff] %vm542, %v550
        %553 = vrot.lane.b32.xlu0 %v539, 120
        %v554 = vpop.permute.xlu0 %553
        %s556 = scalar_lea.vmem %s410, 8 [#allocation11]
        %557 = vst.msk [vmem:[%s556] sm:$0xff] %vm542, %v554
        %558 = vrot.lane.b32.xlu0 %v539, 88
        %v559 = vpop.permute.xlu0 %558
        %s561 = scalar_lea.vmem %s417, 8 [#allocation12]
        %562 = vst.msk [vmem:[%s561] sm:$0xff] %vm542, %v559
        %563 = vrot.lane.b32.xlu0 %v539, 56
        %v564 = vpop.permute.xlu0 %563
        %s566 = scalar_lea.vmem %s424, 8 [#allocation14]
        %567 = vst.msk [vmem:[%s566] sm:$0xff] %vm542, %v564
        %568 = vrot.lane.b32.xlu0 %v539, 112
        %v569 = vpop.permute.xlu0 %568
        %s571 = scalar_lea.vmem %s410, 16 [#allocation11]
        %572 = vst.msk [vmem:[%s571] sm:$0xff] %vm542, %v569
        %573 = vrot.lane.b32.xlu0 %v539, 80
        %v574 = vpop.permute.xlu0 %573
        %s576 = scalar_lea.vmem %s417, 16 [#allocation12]
        %577 = vst.msk [vmem:[%s576] sm:$0xff] %vm542, %v574
        %578 = vrot.lane.b32.xlu0 %v539, 48
        %v579 = vpop.permute.xlu0 %578
        %s581 = scalar_lea.vmem %s424, 16 [#allocation14]
        %582 = vst.msk [vmem:[%s581] sm:$0xff] %vm542, %v579
        %583 = vrot.lane.b32.xlu0 %v539, 104
        %v584 = vpop.permute.xlu0 %583
        %s586 = scalar_lea.vmem %s410, 24 [#allocation11]
        %587 = vst.msk [vmem:[%s586] sm:$0xff] %vm542, %v584
        %588 = vrot.lane.b32.xlu0 %v539, 72
        %v589 = vpop.permute.xlu0 %588
        %s591 = scalar_lea.vmem %s417, 24 [#allocation12]
        %592 = vst.msk [vmem:[%s591] sm:$0xff] %vm542, %v589
        %593 = vrot.lane.b32.xlu0 %v539, 40
        %v594 = vpop.permute.xlu0 %593
        %s596 = scalar_lea.vmem %s424, 24 [#allocation14]
        %597 = vst.msk [vmem:[%s596] sm:$0xff] %vm542, %v594
        %s598 = sand.u32 %s176, 1
        %s599 = scalar_lea.sflag [#allocation4], %s598
        %s600 = sand.u32 %s176, 1
        %s601 = smul.addr %s600, 32
        %s602 = scalar_lea.vmem [#allocation11], %s601
        %s603 = sand.u32 %s32, 1
        %s604 = scalar_lea.sflag [#allocation13], %s603
        %s605 = sand.u32 %s204, 1
        %s606 = smul.addr %s605, 32
        %s607 = scalar_lea.vmem [#allocation12], %s606
        %s608 = sand.u32 %s32, 1
        %s609 = scalar_lea.sflag [#allocation13], %s608
        %s610 = sand.u32 %s232, 1
        %s611 = smul.addr %s610, 32
        %s612 = scalar_lea.vmem [#allocation14], %s611
        // Predicated region
        $region61: #{tpu_custom_call.1} parent=39 // pred_check
          %p613 = pneg %p186
        $region62: #{tpu_custom_call.1} parent=39 // pred_check_branch
          %615 = sbr.rel (%p613) target = $region64
        $region63: #{tpu_custom_call.1} parent=39 // pred_region
          %s617 = ssub.s32 512, 512
          %618 = vsyncadd %s599, %s617
          %s619 = smul.addr %s36, 4
          %s620 = sadd.s32 %s37, %s619
          %s621 = smul.addr %s620, 128
          %s622 = scalar_lea.hbm %s5, %s621
          %s623 = sshll.u32 %s602, 4
          %s624 = int_to_ptr.vmem [resolvable:$true] %s623
          %629 = dma.vmem_to_hbm [thread:$0]  %s624, 512, %s622, %s599, 128, 128, 8
        $region64: #{tpu_custom_call.1} parent=39 // pred_fallthru
          _
        // Predicated region
        $region65: #{tpu_custom_call.1} parent=39 // pred_check
          %p630 = pneg %p214
        $region66: #{tpu_custom_call.1} parent=39 // pred_check_branch
          %632 = sbr.rel (%p630) target = $region68
        $region67: #{tpu_custom_call.1} parent=39 // pred_region
          %s634 = ssub.s32 512, 512
          %635 = vsyncadd %s604, %s634
          %s636 = smul.addr %s36, 4
          %s637 = sadd.s32 %s37, %s636
          %s638 = smul.addr %s637, 128
          %s639 = scalar_lea.hbm %s6, %s638
          %s640 = sshll.u32 %s607, 4
          %s641 = int_to_ptr.vmem [resolvable:$true] %s640
          %646 = dma.vmem_to_hbm [thread:$0]  %s641, 512, %s639, %s604, 128, 128, 8
        $region68: #{tpu_custom_call.1} parent=39 // pred_fallthru
          _
        // Predicated region
        $region69: #{tpu_custom_call.1} parent=39 // pred_check
          %p647 = pneg %p242
        $region70: #{tpu_custom_call.1} parent=39 // pred_check_branch
          %649 = sbr.rel (%p647) target = $region72
        $region71: #{tpu_custom_call.1} parent=39 // pred_region
          %s651 = ssub.s32 512, 512
          %652 = vsyncadd %s609, %s651
          %s653 = smul.addr %s36, 4
          %s654 = sadd.s32 %s37, %s653
          %s655 = smul.addr %s654, 128
          %s656 = scalar_lea.hbm %s7, %s655
          %s657 = sshll.u32 %s612, 4
          %s658 = int_to_ptr.vmem [resolvable:$true] %s657
          %663 = dma.vmem_to_hbm [thread:$0]  %s658, 512, %s656, %s609, 128, 128, 8
        $region72: #{tpu_custom_call.1} parent=39 // pred_fallthru
          _
      $region40: #{tpu_custom_call.1} parent=5 // pred_fallthru
        _
      %p664 = scmp.le.s32.totalorder 2, %s27
      // Predicated region
      $region73: #{tpu_custom_call.1} parent=5 // pred_check
        %p665 = pneg %p664
      $region74: #{tpu_custom_call.1} parent=5 // pred_check_branch
        %667 = sbr.rel (%p665) target = $region76
      $region75: #{tpu_custom_call.1} parent=5 // pred_region
        %s668 = ssub.s32 %s27, 2
        // Predicated region
        $region77: #{tpu_custom_call.1} parent=75 // pred_check
          %p669 = pneg %p192
        $region78: #{tpu_custom_call.1} parent=75 // pred_check_branch
          %671 = sbr.rel (%p669) target = $region80
        $region79: #{tpu_custom_call.1} parent=75 // pred_region
          %s672 = sand.u32 %s177, 1
          %s673 = scalar_lea.sflag [#allocation4], %s672
          %s674 = sand.u32 %s177, 1
          %s675 = smul.addr %s674, 32
          %s676 = scalar_lea.vmem [#allocation11], %s675
          %677 = dma.done %s673, 512
        $region80: #{tpu_custom_call.1} parent=75 // pred_fallthru
          _
        // Predicated region
        $region81: #{tpu_custom_call.1} parent=75 // pred_check
          %p678 = pneg %p220
        $region82: #{tpu_custom_call.1} parent=75 // pred_check_branch
          %680 = sbr.rel (%p678) target = $region84
        $region83: #{tpu_custom_call.1} parent=75 // pred_region
          %s681 = sand.u32 %s33, 1
          %s682 = scalar_lea.sflag [#allocation13], %s681
          %s683 = sand.u32 %s205, 1
          %s684 = smul.addr %s683, 32
          %s685 = scalar_lea.vmem [#allocation12], %s684
          %686 = dma.done %s682, 512
        $region84: #{tpu_custom_call.1} parent=75 // pred_fallthru
          _
        // Predicated region
        $region85: #{tpu_custom_call.1} parent=75 // pred_check
          %p687 = pneg %p248
        $region86: #{tpu_custom_call.1} parent=75 // pred_check_branch
          %689 = sbr.rel (%p687) target = $region88
        $region87: #{tpu_custom_call.1} parent=75 // pred_region
          %s690 = sand.u32 %s33, 1
          %s691 = scalar_lea.sflag [#allocation13], %s690
          %s692 = sand.u32 %s233, 1
          %s693 = smul.addr %s692, 32
          %s694 = scalar_lea.vmem [#allocation14], %s693
          %695 = dma.done %s691, 512
        $region88: #{tpu_custom_call.1} parent=75 // pred_fallthru
          _
      $region76: #{tpu_custom_call.1} parent=5 // pred_fallthru
        _
    $region6: #{tpu_custom_call.1} parent=1 // loop_footer
      %s31 = sadd.s32 1, %s27
    $region7: #{tpu_custom_call.1} parent=1 // loop_footer_branch
      %26 = sbr.rel target = $region3
    $region8: #{tpu_custom_call.1} parent=1 // loop_exit
      _
    %696 = vsyncpa [#allocation3], 1
    %s697 = scalar_lea.sflag [#allocation3], 1
    %698 = vsyncpa %s697, 1
    %699 = vsyncpa [#allocation6], 1
    %s700 = scalar_lea.sflag [#allocation6], 1
    %701 = vsyncpa %s700, 1
    %702 = vsyncpa [#allocation9], 1
    %703 = vsyncpa [#allocation4], 1
    %s704 = scalar_lea.sflag [#allocation4], 1
    %705 = vsyncpa %s704, 1
    %706 = vsyncpa [#allocation13], 1
    %s707 = scalar_lea.sflag [#allocation13], 1
    %708 = vsyncpa %s707, 1

</llo_original>
